<compile_context>
chip_gen: v7x
topology: tpu7x:2x2x1
jax: 0.10.0
libtpu: 0.0.40
codegen_flags: <defaults>
</compile_context>

<pallas_src>
import math

import jax
import jax.numpy as jnp
from jax.experimental import pallas as pl
from jax.experimental.pallas import tpu as pltpu

EPS = 1e-6


def _make_block_kernel(n_heads: int, d_h: int, fuse_final_ln: bool):
    """One EncoderBlock (optionally + final LayerNorm) on one (batch, q-tile)."""
    H = n_heads
    scale = 1.0 / math.sqrt(float(d_h))

    def kernel(x_q_ref, x_kv_ref, mask_ref,
               wq_ref, bq_ref, wkv_ref, bkv_ref, wo3_ref, bo_ref,
               w1_ref, b1_ref, w2_ref, b2_ref,
               ln1a_ref, ln1b_ref, ln2a_ref, ln2b_ref,
               *rest):
        if fuse_final_ln:
            lnfa_ref, lnfb_ref, o_ref, k_sc, v_sc, q_sc = rest
        else:
            lnfa_ref = lnfb_ref = None
            o_ref, k_sc, v_sc, q_sc = rest

        qi = pl.program_id(1)
        D = x_q_ref.shape[-1]
        inv_dm1 = 1.0 / float(D - 1)

        def layernorm(y, a_ref, b_ref):
            # torch Tensor.std(): UNBIASED (D-1); module normalizes by (std+eps)
            mean = jnp.mean(y, axis=-1, keepdims=True)
            var = jnp.sum((y - mean) ** 2, axis=-1, keepdims=True) * inv_dm1
            inv = pl.reciprocal(jnp.sqrt(var) + EPS)          # EUP, not a VPU divide
            return a_ref[...] * ((y - mean) * inv) + b_ref[...]

        # ---- fused K/V projection: once per batch element (first q-tile) ----
        @pl.when(qi == 0)
        def _():
            xkv = x_kv_ref[0].astype(jnp.bfloat16)            # (S, D)
            kv = jnp.dot(xkv, wkv_ref[...],
                         preferred_element_type=jnp.float32) + bkv_ref[...]
            k2 = kv[:, :D]                                    # (S, D)
            v2 = kv[:, D:]
            # one-time layout staging into head-major (H, S, d_h) scratch so
            # every attention matmul below is a leading-batch contraction
            for h in range(H):
                sl = slice(h * d_h, (h + 1) * d_h)
                k_sc[h] = k2[:, sl].astype(jnp.bfloat16)
                v_sc[h] = v2[:, sl].astype(jnp.bfloat16)

        # ---- Q projection for this query tile; 1/sqrt(d_h) folded into q ----
        x_res = x_q_ref[0].astype(jnp.float32)                # (tS, D) residual
        q = jnp.dot(x_res.astype(jnp.bfloat16), wq_ref[...],
                    preferred_element_type=jnp.float32) + bq_ref[...]
        q = q * scale
        for h in range(H):                                    # layout staging only
            q_sc[h] = q[:, h * d_h:(h + 1) * d_h].astype(jnp.bfloat16)

        q3 = q_sc[...]                                        # (H, tS, d_h) bf16
        k3 = k_sc[...]                                        # (H, S,  d_h) bf16
        v3 = v_sc[...]

        # ---- attention: all heads in one batched MXU contraction ----
        scores = jnp.einsum('hqd,hkd->hqk', q3, k3,
                            preferred_element_type=jnp.float32)   # (H, tS, S) f32
        masked = mask_ref[0].astype(jnp.float32) == 0.0           # compare once
        scores = jnp.where(masked[None, :, :], jnp.float32(-1e9), scores)
        scores = scores - jnp.max(scores, axis=-1, keepdims=True)
        e = jnp.exp(scores)
        attn = e * pl.reciprocal(jnp.sum(e, axis=-1, keepdims=True), approx=True)
        ctx = jnp.einsum('hqk,hkd->hqd', attn.astype(jnp.bfloat16), v3,
                         preferred_element_type=jnp.float32)      # (H, tS, d_h)

        # ---- output projection: W_O applied per head and summed (== concat+matmul,
        #      but without a lane-dim concatenate) ----
        per_head = jnp.einsum('hqc,hcd->hqd', ctx.astype(jnp.bfloat16), wo3_ref[...],
                              preferred_element_type=jnp.float32)  # (H, tS, D)
        attn_out = per_head[0]
        for h in range(1, H):                                  # unrolled head-sum
            attn_out = attn_out + per_head[h]
        attn_out = attn_out + bo_ref[...]

        x1 = layernorm(x_res + attn_out, ln1a_ref, ln1b_ref)

        # ---- position-wise FFN (bf16 MXU, f32 accumulate) ----
        h1 = jnp.dot(x1.astype(jnp.bfloat16), w1_ref[...],
                     preferred_element_type=jnp.float32) + b1_ref[...]
        h1 = jnp.maximum(h1, 0.0)
        ffn = jnp.dot(h1.astype(jnp.bfloat16), w2_ref[...],
                      preferred_element_type=jnp.float32) + b2_ref[...]
        x2 = layernorm(x1 + ffn, ln2a_ref, ln2b_ref)

        if fuse_final_ln:                                      # fused encoder-final LN
            x2 = layernorm(x2, lnfa_ref, lnfb_ref)

        o_ref[0] = x2.astype(o_ref.dtype)

    return kernel


def _pick_tile_s(S):
    for t in (512, 256, 128, 64, 32, 16):
        if S % t == 0:
            return t
    return S  # single tile (block == full dims is always legal)


def encoder_block_apply(x, mask_bf16, params, n_heads, *, tile_s=None, final_ln=None):
    B, S, D = x.shape
    assert D % n_heads == 0
    d_h = D // n_heads
    if tile_s is None:
        tile_s = _pick_tile_s(S)
    assert S % tile_s == 0
    n_qt = S // tile_s

    # ---- weight prep (plain JAX, outside the kernel): K/V fusion, head-major
    #      W_O, bf16 MXU operands.  Biases / LN params stay f32. ----
    wq = params["wq"].astype(jnp.bfloat16)
    bq = params["bq"]
    wkv = jnp.concatenate([params["wk"], params["wv"]], axis=1).astype(jnp.bfloat16)
    bkv = jnp.concatenate([params["bk"], params["bv"]], axis=1)
    wo3 = params["wo"].astype(jnp.bfloat16).reshape(n_heads, d_h, D)
    bo = params["bo"]
    w1 = params["w1"].astype(jnp.bfloat16)
    b1 = params["b1"]
    w2 = params["w2"].astype(jnp.bfloat16)
    b2 = params["b2"]

    weights = [wq, bq, wkv, bkv, wo3, bo, w1, b1, w2, b2,
               params["ln1_a"], params["ln1_b"], params["ln2_a"], params["ln2_b"]]
    fuse_final = final_ln is not None
    if fuse_final:
        weights += [final_ln["alpha"], final_ln["bias"]]

    kernel = _make_block_kernel(n_heads, d_h, fuse_final)

    def _full(w):
        nd = w.ndim
        return pl.BlockSpec(w.shape, lambda b, q, _nd=nd: (0,) * _nd)

    in_specs = [
        pl.BlockSpec((1, tile_s, D), lambda b, q: (b, q, 0)),   # x: query tile
        pl.BlockSpec((1, S, D),      lambda b, q: (b, 0, 0)),   # x: full seq (K/V)
        pl.BlockSpec((1, tile_s, S), lambda b, q: (b, q, 0)),   # mask rows (bf16)
    ] + [_full(w) for w in weights]

    return pl.pallas_call(
        kernel,
        out_shape=jax.ShapeDtypeStruct((B, S, D), x.dtype),
        grid=(B, n_qt),
        in_specs=in_specs,
        out_specs=pl.BlockSpec((1, tile_s, D), lambda b, q: (b, q, 0)),
        scratch_shapes=[
            pltpu.VMEM((n_heads, S, d_h), jnp.bfloat16),       # K, head-major
            pltpu.VMEM((n_heads, S, d_h), jnp.bfloat16),       # V, head-major
            pltpu.VMEM((n_heads, tile_s, d_h), jnp.bfloat16),  # Q staging
        ],
        compiler_params=pltpu.CompilerParams(
            dimension_semantics=("parallel", "arbitrary")),
    )(x, x, mask_bf16, *weights)


def encoder_forward(x, mask, layer_params, final_ln, n_heads, *, tile_s=None):
    """mask: (B, S, S), nonzero = keep.  Dropout layers are identity (eval mode)."""
    assert len(layer_params) >= 1
    # compact 0/1 mask in bf16: half the HBM traffic of f32, exact 0/1 values
    mask_bf16 = (mask != 0).astype(jnp.bfloat16)
    n = len(layer_params)
    for i, p in enumerate(layer_params):
        fl = final_ln if i == n - 1 else None    # fuse final LN into last block
        x = encoder_block_apply(x, mask_bf16, p, n_heads, tile_s=tile_s, final_ln=fl)
    return x


def init_params(key, n_layers, d_model):
    """Deterministic synthetic parameters.

    Linear weights are stored pre-transposed as (in, out) so the kernel computes
    x @ W + b (== torch's x @ W.T + b).  Biases / LN params are (1, D) rows.
    """
    params = []
    for l in range(n_layers):
        ks = jax.random.split(jax.random.fold_in(key, l), 8)
        s = 0.02
        p = {
            "wq": s * jax.random.normal(ks[0], (d_model, d_model), jnp.float32),
            "bq": jnp.zeros((1, d_model), jnp.float32),
            "wk": s * jax.random.normal(ks[1], (d_model, d_model), jnp.float32),
            "bk": jnp.zeros((1, d_model), jnp.float32),
            "wv": s * jax.random.normal(ks[2], (d_model, d_model), jnp.float32),
            "bv": jnp.zeros((1, d_model), jnp.float32),
            "wo": s * jax.random.normal(ks[3], (d_model, d_model), jnp.float32),
            "bo": s * jax.random.normal(ks[4], (1, d_model), jnp.float32),
            "w1": s * jax.random.normal(ks[5], (d_model, 4 * d_model), jnp.float32),
            "b1": s * jax.random.normal(ks[6], (1, 4 * d_model), jnp.float32),
            "w2": s * jax.random.normal(ks[7], (4 * d_model, d_model), jnp.float32),
            "b2": jnp.zeros((1, d_model), jnp.float32),
            "ln1_a": jnp.ones((1, d_model), jnp.float32),
            "ln1_b": jnp.zeros((1, d_model), jnp.float32),
            "ln2_a": jnp.ones((1, d_model), jnp.float32),
            "ln2_b": jnp.zeros((1, d_model), jnp.float32),
        }
        params.append(p)
    final_ln = {"alpha": jnp.ones((1, d_model), jnp.float32),
                "bias": jnp.zeros((1, d_model), jnp.float32)}
    return params, final_ln


if __name__ == "__main__":
    # Small config consistent with the module; S=32 / tile_s=16 exercises the
    # multi-query-tile path and the once-per-batch K/V scratch reuse.
    N_LAYERS, D_MODEL, N_HEADS = 2, 32, 4
    B, S, TILE_S = 2, 32, 16

    key = jax.random.PRNGKey(0)
    kx, kp = jax.random.split(key)
    x = jax.random.normal(kx, (B, S, D_MODEL), jnp.float32)
    # padding-style mask: last 4 key positions of batch 1 masked out
    mask = jnp.ones((B, S, S), jnp.float32)
    mask = mask.at[1, :, S - 4:].set(0.0)

    layer_params, final_ln = init_params(kp, N_LAYERS, D_MODEL)

    out = encoder_forward(x, mask, layer_params, final_ln, N_HEADS, tile_s=TILE_S)
    out = jax.block_until_ready(out)
    assert out.shape == (B, S, D_MODEL)
    assert bool(jnp.all(jnp.isfinite(out)))
    print("KERNEL_OK")
</pallas_src>

<mosaic_0001>
module attributes {stable_mosaic.version = 11 : i64} {
  func.func @kernel(%arg0: i32, %arg1: i32, %arg2: memref<1x16x32xf32, #tpu.memory_space<vmem>>, %arg3: memref<1x32x32xf32, #tpu.memory_space<vmem>>, %arg4: memref<1x16x32xbf16, #tpu.memory_space<vmem>>, %arg5: memref<32x32xbf16, #tpu.memory_space<vmem>>, %arg6: memref<1x32xf32, #tpu.memory_space<vmem>>, %arg7: memref<32x64xbf16, #tpu.memory_space<vmem>>, %arg8: memref<1x64xf32, #tpu.memory_space<vmem>>, %arg9: memref<4x8x32xbf16, #tpu.memory_space<vmem>>, %arg10: memref<1x32xf32, #tpu.memory_space<vmem>>, %arg11: memref<32x128xbf16, #tpu.memory_space<vmem>>, %arg12: memref<1x128xf32, #tpu.memory_space<vmem>>, %arg13: memref<128x32xbf16, #tpu.memory_space<vmem>>, %arg14: memref<1x32xf32, #tpu.memory_space<vmem>>, %arg15: memref<1x32xf32, #tpu.memory_space<vmem>>, %arg16: memref<1x32xf32, #tpu.memory_space<vmem>>, %arg17: memref<1x32xf32, #tpu.memory_space<vmem>>, %arg18: memref<1x32xf32, #tpu.memory_space<vmem>>, %arg19: memref<1x16x32xf32, #tpu.memory_space<vmem>>, %arg20: memref<4x32x8xbf16, #tpu.memory_space<vmem>>, %arg21: memref<4x32x8xbf16, #tpu.memory_space<vmem>>, %arg22: memref<4x16x8xbf16, #tpu.memory_space<vmem>>) attributes {dimension_semantics = [#tpu.dimension_semantics<parallel>, #tpu.dimension_semantics<arbitrary>], iteration_bounds = array<i64: 2, 2>, scalar_prefetch = 0 : i64, scratch_operands = 3 : i64, tpu.core_type = #tpu.core_type<tc>, window_params = [{transform_indices = @transform_0, window_bounds = array<i64: 1, 16, 32>}, {transform_indices = @transform_1, window_bounds = array<i64: 1, 32, 32>}, {transform_indices = @transform_2, window_bounds = array<i64: 1, 16, 32>}, {pipeline_mode = #tpu.pipeline_mode<synchronous>, transform_indices = @transform_3, window_bounds = array<i64: 32, 32>}, {pipeline_mode = #tpu.pipeline_mode<synchronous>, transform_indices = @transform_4, window_bounds = array<i64: 1, 32>}, {pipeline_mode = #tpu.pipeline_mode<synchronous>, transform_indices = @transform_5, window_bounds = array<i64: 32, 64>}, {pipeline_mode = #tpu.pipeline_mode<synchronous>, transform_indices = @transform_6, window_bounds = array<i64: 1, 64>}, {pipeline_mode = #tpu.pipeline_mode<synchronous>, transform_indices = @transform_7, window_bounds = array<i64: 4, 8, 32>}, {pipeline_mode = #tpu.pipeline_mode<synchronous>, transform_indices = @transform_8, window_bounds = array<i64: 1, 32>}, {pipeline_mode = #tpu.pipeline_mode<synchronous>, transform_indices = @transform_9, window_bounds = array<i64: 32, 128>}, {pipeline_mode = #tpu.pipeline_mode<synchronous>, transform_indices = @transform_10, window_bounds = array<i64: 1, 128>}, {pipeline_mode = #tpu.pipeline_mode<synchronous>, transform_indices = @transform_11, window_bounds = array<i64: 128, 32>}, {pipeline_mode = #tpu.pipeline_mode<synchronous>, transform_indices = @transform_12, window_bounds = array<i64: 1, 32>}, {pipeline_mode = #tpu.pipeline_mode<synchronous>, transform_indices = @transform_13, window_bounds = array<i64: 1, 32>}, {pipeline_mode = #tpu.pipeline_mode<synchronous>, transform_indices = @transform_14, window_bounds = array<i64: 1, 32>}, {pipeline_mode = #tpu.pipeline_mode<synchronous>, transform_indices = @transform_15, window_bounds = array<i64: 1, 32>}, {pipeline_mode = #tpu.pipeline_mode<synchronous>, transform_indices = @transform_16, window_bounds = array<i64: 1, 32>}, {transform_indices = @transform_17, window_bounds = array<i64: 1, 16, 32>}]} {
    %c0_i32 = arith.constant 0 : i32
    %0 = arith.cmpi eq, %arg1, %c0_i32 : i32
    %1 = arith.extui %0 : i1 to i32
    %c0_i32_0 = arith.constant 0 : i32
    %2 = arith.cmpi ne, %1, %c0_i32_0 : i32
    scf.if %2 {
      %c0_73 = arith.constant 0 : index
      %c0_74 = arith.constant 0 : index
      %c0_75 = arith.constant 0 : index
      %145 = vector.load %arg3[%c0_73, %c0_74, %c0_75] : memref<1x32x32xf32, #tpu.memory_space<vmem>>, vector<1x32x32xf32>
      %146 = vector.shape_cast %145 : vector<1x32x32xf32> to vector<32x32xf32>
      %147 = arith.truncf %146 : vector<32x32xf32> to vector<32x32xbf16>
      %c0_76 = arith.constant 0 : index
      %c0_77 = arith.constant 0 : index
      %148 = vector.load %arg7[%c0_76, %c0_77] : memref<32x64xbf16, #tpu.memory_space<vmem>>, vector<32x64xbf16>
      %cst_78 = arith.constant dense<0.000000e+00> : vector<32x64xf32>
      %149 = tpu.matmul %147, %148, %cst_78 {dimension_numbers = #tpu.dot_dimension_numbers<[1], [0], [0], [1], [0, 0, 1, 1], [], []>} : vector<32x32xbf16>, vector<32x64xbf16>, vector<32x64xf32> -> vector<32x64xf32>
      %c0_79 = arith.constant 0 : index
      %c0_80 = arith.constant 0 : index
      %150 = vector.load %arg8[%c0_79, %c0_80] : memref<1x64xf32, #tpu.memory_space<vmem>>, vector<1x64xf32>
      %151 = vector.broadcast %150 : vector<1x64xf32> to vector<32x64xf32>
      %152 = arith.addf %149, %151 : vector<32x64xf32>
      %153 = vector.extract_strided_slice %152 {offsets = [0, 0], sizes = [32, 32], strides = [1, 1]} : vector<32x64xf32> to vector<32x32xf32>
      %154 = vector.extract_strided_slice %152 {offsets = [0, 32], sizes = [32, 32], strides = [1, 1]} : vector<32x64xf32> to vector<32x32xf32>
      %155 = vector.extract_strided_slice %153 {offsets = [0, 0], sizes = [32, 8], strides = [1, 1]} : vector<32x32xf32> to vector<32x8xf32>
      %156 = arith.truncf %155 : vector<32x8xf32> to vector<32x8xbf16>
      %c0_81 = arith.constant 0 : index
      %c0_82 = arith.constant 0 : index
      %c0_83 = arith.constant 0 : index
      %157 = vector.load %arg20[%c0_81, %c0_82, %c0_83] : memref<4x32x8xbf16, #tpu.memory_space<vmem>>, vector<1x32x8xbf16>
      %158 = vector.shape_cast %157 : vector<1x32x8xbf16> to vector<32x8xbf16>
      %159 = vector.shape_cast %156 : vector<32x8xbf16> to vector<1x32x8xbf16>
      tpu.vector_store %arg20[%c0_81, %c0_82, %c0_83], %159 {strides = array<i32>} : memref<4x32x8xbf16, #tpu.memory_space<vmem>>, vector<1x32x8xbf16>,
      %160 = vector.extract_strided_slice %154 {offsets = [0, 0], sizes = [32, 8], strides = [1, 1]} : vector<32x32xf32> to vector<32x8xf32>
      %161 = arith.truncf %160 : vector<32x8xf32> to vector<32x8xbf16>
      %c0_84 = arith.constant 0 : index
      %c0_85 = arith.constant 0 : index
      %c0_86 = arith.constant 0 : index
      %162 = vector.load %arg21[%c0_84, %c0_85, %c0_86] : memref<4x32x8xbf16, #tpu.memory_space<vmem>>, vector<1x32x8xbf16>
      %163 = vector.shape_cast %162 : vector<1x32x8xbf16> to vector<32x8xbf16>
      %164 = vector.shape_cast %161 : vector<32x8xbf16> to vector<1x32x8xbf16>
      tpu.vector_store %arg21[%c0_84, %c0_85, %c0_86], %164 {strides = array<i32>} : memref<4x32x8xbf16, #tpu.memory_space<vmem>>, vector<1x32x8xbf16>,
      %165 = vector.extract_strided_slice %153 {offsets = [0, 8], sizes = [32, 8], strides = [1, 1]} : vector<32x32xf32> to vector<32x8xf32>
      %166 = arith.truncf %165 : vector<32x8xf32> to vector<32x8xbf16>
      %c1_87 = arith.constant 1 : index
      %c0_88 = arith.constant 0 : index
      %c0_89 = arith.constant 0 : index
      %167 = vector.load %arg20[%c1_87, %c0_88, %c0_89] : memref<4x32x8xbf16, #tpu.memory_space<vmem>>, vector<1x32x8xbf16>
      %168 = vector.shape_cast %167 : vector<1x32x8xbf16> to vector<32x8xbf16>
      %169 = vector.shape_cast %166 : vector<32x8xbf16> to vector<1x32x8xbf16>
      tpu.vector_store %arg20[%c1_87, %c0_88, %c0_89], %169 {strides = array<i32>} : memref<4x32x8xbf16, #tpu.memory_space<vmem>>, vector<1x32x8xbf16>,
      %170 = vector.extract_strided_slice %154 {offsets = [0, 8], sizes = [32, 8], strides = [1, 1]} : vector<32x32xf32> to vector<32x8xf32>
      %171 = arith.truncf %170 : vector<32x8xf32> to vector<32x8xbf16>
      %c1_90 = arith.constant 1 : index
      %c0_91 = arith.constant 0 : index
      %c0_92 = arith.constant 0 : index
      %172 = vector.load %arg21[%c1_90, %c0_91, %c0_92] : memref<4x32x8xbf16, #tpu.memory_space<vmem>>, vector<1x32x8xbf16>
      %173 = vector.shape_cast %172 : vector<1x32x8xbf16> to vector<32x8xbf16>
      %174 = vector.shape_cast %171 : vector<32x8xbf16> to vector<1x32x8xbf16>
      tpu.vector_store %arg21[%c1_90, %c0_91, %c0_92], %174 {strides = array<i32>} : memref<4x32x8xbf16, #tpu.memory_space<vmem>>, vector<1x32x8xbf16>,
      %175 = vector.extract_strided_slice %153 {offsets = [0, 16], sizes = [32, 8], strides = [1, 1]} : vector<32x32xf32> to vector<32x8xf32>
      %176 = arith.truncf %175 : vector<32x8xf32> to vector<32x8xbf16>
      %c2_93 = arith.constant 2 : index
      %c0_94 = arith.constant 0 : index
      %c0_95 = arith.constant 0 : index
      %177 = vector.load %arg20[%c2_93, %c0_94, %c0_95] : memref<4x32x8xbf16, #tpu.memory_space<vmem>>, vector<1x32x8xbf16>
      %178 = vector.shape_cast %177 : vector<1x32x8xbf16> to vector<32x8xbf16>
      %179 = vector.shape_cast %176 : vector<32x8xbf16> to vector<1x32x8xbf16>
      tpu.vector_store %arg20[%c2_93, %c0_94, %c0_95], %179 {strides = array<i32>} : memref<4x32x8xbf16, #tpu.memory_space<vmem>>, vector<1x32x8xbf16>,
      %180 = vector.extract_strided_slice %154 {offsets = [0, 16], sizes = [32, 8], strides = [1, 1]} : vector<32x32xf32> to vector<32x8xf32>
      %181 = arith.truncf %180 : vector<32x8xf32> to vector<32x8xbf16>
      %c2_96 = arith.constant 2 : index
      %c0_97 = arith.constant 0 : index
      %c0_98 = arith.constant 0 : index
      %182 = vector.load %arg21[%c2_96, %c0_97, %c0_98] : memref<4x32x8xbf16, #tpu.memory_space<vmem>>, vector<1x32x8xbf16>
      %183 = vector.shape_cast %182 : vector<1x32x8xbf16> to vector<32x8xbf16>
      %184 = vector.shape_cast %181 : vector<32x8xbf16> to vector<1x32x8xbf16>
      tpu.vector_store %arg21[%c2_96, %c0_97, %c0_98], %184 {strides = array<i32>} : memref<4x32x8xbf16, #tpu.memory_space<vmem>>, vector<1x32x8xbf16>,
      %185 = vector.extract_strided_slice %153 {offsets = [0, 24], sizes = [32, 8], strides = [1, 1]} : vector<32x32xf32> to vector<32x8xf32>
      %186 = arith.truncf %185 : vector<32x8xf32> to vector<32x8xbf16>
      %c3_99 = arith.constant 3 : index
      %c0_100 = arith.constant 0 : index
      %c0_101 = arith.constant 0 : index
      %187 = vector.load %arg20[%c3_99, %c0_100, %c0_101] : memref<4x32x8xbf16, #tpu.memory_space<vmem>>, vector<1x32x8xbf16>
      %188 = vector.shape_cast %187 : vector<1x32x8xbf16> to vector<32x8xbf16>
      %189 = vector.shape_cast %186 : vector<32x8xbf16> to vector<1x32x8xbf16>
      tpu.vector_store %arg20[%c3_99, %c0_100, %c0_101], %189 {strides = array<i32>} : memref<4x32x8xbf16, #tpu.memory_space<vmem>>, vector<1x32x8xbf16>,
      %190 = vector.extract_strided_slice %154 {offsets = [0, 24], sizes = [32, 8], strides = [1, 1]} : vector<32x32xf32> to vector<32x8xf32>
      %191 = arith.truncf %190 : vector<32x8xf32> to vector<32x8xbf16>
      %c3_102 = arith.constant 3 : index
      %c0_103 = arith.constant 0 : index
      %c0_104 = arith.constant 0 : index
      %192 = vector.load %arg21[%c3_102, %c0_103, %c0_104] : memref<4x32x8xbf16, #tpu.memory_space<vmem>>, vector<1x32x8xbf16>
      %193 = vector.shape_cast %192 : vector<1x32x8xbf16> to vector<32x8xbf16>
      %194 = vector.shape_cast %191 : vector<32x8xbf16> to vector<1x32x8xbf16>
      tpu.vector_store %arg21[%c3_102, %c0_103, %c0_104], %194 {strides = array<i32>} : memref<4x32x8xbf16, #tpu.memory_space<vmem>>, vector<1x32x8xbf16>,
    } else {
    }
    %c0 = arith.constant 0 : index
    %c0_1 = arith.constant 0 : index
    %c0_2 = arith.constant 0 : index
    %3 = vector.load %arg2[%c0, %c0_1, %c0_2] : memref<1x16x32xf32, #tpu.memory_space<vmem>>, vector<1x16x32xf32>
    %4 = vector.shape_cast %3 : vector<1x16x32xf32> to vector<16x32xf32>
    %5 = arith.truncf %4 : vector<16x32xf32> to vector<16x32xbf16>
    %c0_3 = arith.constant 0 : index
    %c0_4 = arith.constant 0 : index
    %6 = vector.load %arg5[%c0_3, %c0_4] : memref<32x32xbf16, #tpu.memory_space<vmem>>, vector<32x32xbf16>
    %cst = arith.constant dense<0.000000e+00> : vector<16x32xf32>
    %7 = tpu.matmul %5, %6, %cst {dimension_numbers = #tpu.dot_dimension_numbers<[1], [0], [0], [1], [0, 0, 1, 1], [], []>} : vector<16x32xbf16>, vector<32x32xbf16>, vector<16x32xf32> -> vector<16x32xf32>
    %c0_5 = arith.constant 0 : index
    %c0_6 = arith.constant 0 : index
    %8 = vector.load %arg6[%c0_5, %c0_6] : memref<1x32xf32, #tpu.memory_space<vmem>>, vector<1x32xf32>
    %9 = vector.broadcast %8 : vector<1x32xf32> to vector<16x32xf32>
    %10 = arith.addf %7, %9 : vector<16x32xf32>
    %cst_7 = arith.constant 0.353553385 : f32
    %11 = vector.broadcast %cst_7 : f32 to vector<16x32xf32>
    %12 = arith.mulf %10, %11 : vector<16x32xf32>
    %13 = vector.extract_strided_slice %12 {offsets = [0, 0], sizes = [16, 8], strides = [1, 1]} : vector<16x32xf32> to vector<16x8xf32>
    %14 = arith.truncf %13 : vector<16x8xf32> to vector<16x8xbf16>
    %c0_8 = arith.constant 0 : index
    %c0_9 = arith.constant 0 : index
    %c0_10 = arith.constant 0 : index
    %15 = vector.load %arg22[%c0_8, %c0_9, %c0_10] : memref<4x16x8xbf16, #tpu.memory_space<vmem>>, vector<1x16x8xbf16>
    %16 = vector.shape_cast %15 : vector<1x16x8xbf16> to vector<16x8xbf16>
    %17 = vector.shape_cast %14 : vector<16x8xbf16> to vector<1x16x8xbf16>
    tpu.vector_store %arg22[%c0_8, %c0_9, %c0_10], %17 {strides = array<i32>} : memref<4x16x8xbf16, #tpu.memory_space<vmem>>, vector<1x16x8xbf16>,
    %18 = vector.extract_strided_slice %12 {offsets = [0, 8], sizes = [16, 8], strides = [1, 1]} : vector<16x32xf32> to vector<16x8xf32>
    %19 = arith.truncf %18 : vector<16x8xf32> to vector<16x8xbf16>
    %c1 = arith.constant 1 : index
    %c0_11 = arith.constant 0 : index
    %c0_12 = arith.constant 0 : index
    %20 = vector.load %arg22[%c1, %c0_11, %c0_12] : memref<4x16x8xbf16, #tpu.memory_space<vmem>>, vector<1x16x8xbf16>
    %21 = vector.shape_cast %20 : vector<1x16x8xbf16> to vector<16x8xbf16>
    %22 = vector.shape_cast %19 : vector<16x8xbf16> to vector<1x16x8xbf16>
    tpu.vector_store %arg22[%c1, %c0_11, %c0_12], %22 {strides = array<i32>} : memref<4x16x8xbf16, #tpu.memory_space<vmem>>, vector<1x16x8xbf16>,
    %23 = vector.extract_strided_slice %12 {offsets = [0, 16], sizes = [16, 8], strides = [1, 1]} : vector<16x32xf32> to vector<16x8xf32>
    %24 = arith.truncf %23 : vector<16x8xf32> to vector<16x8xbf16>
    %c2 = arith.constant 2 : index
    %c0_13 = arith.constant 0 : index
    %c0_14 = arith.constant 0 : index
    %25 = vector.load %arg22[%c2, %c0_13, %c0_14] : memref<4x16x8xbf16, #tpu.memory_space<vmem>>, vector<1x16x8xbf16>
    %26 = vector.shape_cast %25 : vector<1x16x8xbf16> to vector<16x8xbf16>
    %27 = vector.shape_cast %24 : vector<16x8xbf16> to vector<1x16x8xbf16>
    tpu.vector_store %arg22[%c2, %c0_13, %c0_14], %27 {strides = array<i32>} : memref<4x16x8xbf16, #tpu.memory_space<vmem>>, vector<1x16x8xbf16>,
    %28 = vector.extract_strided_slice %12 {offsets = [0, 24], sizes = [16, 8], strides = [1, 1]} : vector<16x32xf32> to vector<16x8xf32>
    %29 = arith.truncf %28 : vector<16x8xf32> to vector<16x8xbf16>
    %c3 = arith.constant 3 : index
    %c0_15 = arith.constant 0 : index
    %c0_16 = arith.constant 0 : index
    %30 = vector.load %arg22[%c3, %c0_15, %c0_16] : memref<4x16x8xbf16, #tpu.memory_space<vmem>>, vector<1x16x8xbf16>
    %31 = vector.shape_cast %30 : vector<1x16x8xbf16> to vector<16x8xbf16>
    %32 = vector.shape_cast %29 : vector<16x8xbf16> to vector<1x16x8xbf16>
    tpu.vector_store %arg22[%c3, %c0_15, %c0_16], %32 {strides = array<i32>} : memref<4x16x8xbf16, #tpu.memory_space<vmem>>, vector<1x16x8xbf16>,
    %c0_17 = arith.constant 0 : index
    %c0_18 = arith.constant 0 : index
    %c0_19 = arith.constant 0 : index
    %33 = vector.load %arg22[%c0_17, %c0_18, %c0_19] : memref<4x16x8xbf16, #tpu.memory_space<vmem>>, vector<4x16x8xbf16>
    %c0_20 = arith.constant 0 : index
    %c0_21 = arith.constant 0 : index
    %c0_22 = arith.constant 0 : index
    %34 = vector.load %arg20[%c0_20, %c0_21, %c0_22] : memref<4x32x8xbf16, #tpu.memory_space<vmem>>, vector<4x32x8xbf16>
    %c0_23 = arith.constant 0 : index
    %c0_24 = arith.constant 0 : index
    %c0_25 = arith.constant 0 : index
    %35 = vector.load %arg21[%c0_23, %c0_24, %c0_25] : memref<4x32x8xbf16, #tpu.memory_space<vmem>>, vector<4x32x8xbf16>
    "tpu.trace_start"() <{level = 10 : i32, message = "hqd,hkd->hqk"}> : () -> ()
    %cst_26 = arith.constant dense<0.000000e+00> : vector<4x16x32xf32>
    %36 = tpu.matmul %33, %34, %cst_26 {dimension_numbers = #tpu.dot_dimension_numbers<[2], [2], [1], [1], [0, 0, 0, 1, 1, 1], [0], [0]>} : vector<4x16x8xbf16>, vector<4x32x8xbf16>, vector<4x16x32xf32> -> vector<4x16x32xf32>
    "tpu.trace_stop"() : () -> ()
    %c0_27 = arith.constant 0 : index
    %c0_28 = arith.constant 0 : index
    %c0_29 = arith.constant 0 : index
    %37 = vector.load %arg4[%c0_27, %c0_28, %c0_29] : memref<1x16x32xbf16, #tpu.memory_space<vmem>>, vector<1x16x32xbf16>
    %38 = vector.shape_cast %37 : vector<1x16x32xbf16> to vector<16x32xbf16>
    %39 = arith.extf %38 : vector<16x32xbf16> to vector<16x32xf32>
    %cst_30 = arith.constant 0.000000e+00 : f32
    %40 = vector.broadcast %cst_30 : f32 to vector<16x32xf32>
    %41 = arith.cmpf oeq, %39, %40 : vector<16x32xf32>
    %42 = vector.shape_cast %41 : vector<16x32xi1> to vector<1x16x32xi1>
    %cst_31 = arith.constant -1.000000e+09 : f32
    %43 = vector.shape_cast %42 : vector<1x16x32xi1> to vector<1x16x32xi1>
    %44 = vector.broadcast %43 : vector<1x16x32xi1> to vector<4x16x32xi1>
    %45 = vector.broadcast %cst_31 : f32 to vector<4x16x32xf32>
    %46 = arith.select %44, %45, %36 : vector<4x16x32xi1>, vector<4x16x32xf32>
    %cst_32 = arith.constant dense<0xFF800000> : vector<4x16xf32>
    %47 = vector.multi_reduction <maximumf>, %46, %cst_32 [2] : vector<4x16x32xf32> to vector<4x16xf32>
    %48 = vector.shape_cast %47 : vector<4x16xf32> to vector<4x16x1xf32>
    %49 = vector.broadcast %48 : vector<4x16x1xf32> to vector<4x16x32xf32>
    %50 = arith.subf %46, %49 : vector<4x16x32xf32>
    %51 = math.exp %50 : vector<4x16x32xf32>
    %cst_33 = arith.constant dense<0.000000e+00> : vector<4x16xf32>
    %52 = vector.multi_reduction <add>, %51, %cst_33 [2] : vector<4x16x32xf32> to vector<4x16xf32>
    %53 = vector.shape_cast %52 : vector<4x16xf32> to vector<4x16x1xf32>
    %54 = tpu.reciprocal %53 {approx = true} : vector<4x16x1xf32> -> vector<4x16x1xf32>
    %55 = vector.broadcast %54 : vector<4x16x1xf32> to vector<4x16x32xf32>
    %56 = arith.mulf %51, %55 : vector<4x16x32xf32>
    %57 = arith.truncf %56 : vector<4x16x32xf32> to vector<4x16x32xbf16>
    "tpu.trace_start"() <{level = 10 : i32, message = "hqk,hkd->hqd"}> : () -> ()
    %cst_34 = arith.constant dense<0.000000e+00> : vector<4x16x8xf32>
    %58 = tpu.matmul %57, %35, %cst_34 {dimension_numbers = #tpu.dot_dimension_numbers<[2], [1], [1], [2], [0, 0, 0, 1, 1, 2], [0], [0]>} : vector<4x16x32xbf16>, vector<4x32x8xbf16>, vector<4x16x8xf32> -> vector<4x16x8xf32>
    "tpu.trace_stop"() : () -> ()
    %59 = arith.truncf %58 : vector<4x16x8xf32> to vector<4x16x8xbf16>
    %c0_35 = arith.constant 0 : index
    %c0_36 = arith.constant 0 : index
    %c0_37 = arith.constant 0 : index
    %60 = vector.load %arg9[%c0_35, %c0_36, %c0_37] : memref<4x8x32xbf16, #tpu.memory_space<vmem>>, vector<4x8x32xbf16>
    "tpu.trace_start"() <{level = 10 : i32, message = "hqc,hcd->hqd"}> : () -> ()
    %cst_38 = arith.constant dense<0.000000e+00> : vector<4x16x32xf32>
    %61 = tpu.matmul %59, %60, %cst_38 {dimension_numbers = #tpu.dot_dimension_numbers<[2], [1], [1], [2], [0, 0, 0, 1, 1, 2], [0], [0]>} : vector<4x16x8xbf16>, vector<4x8x32xbf16>, vector<4x16x32xf32> -> vector<4x16x32xf32>
    "tpu.trace_stop"() : () -> ()
    %62 = vector.extract_strided_slice %61 {offsets = [0, 0, 0], sizes = [1, 16, 32], strides = [1, 1, 1]} : vector<4x16x32xf32> to vector<1x16x32xf32>
    %63 = vector.shape_cast %62 : vector<1x16x32xf32> to vector<16x32xf32>
    %64 = vector.extract_strided_slice %61 {offsets = [1, 0, 0], sizes = [1, 16, 32], strides = [1, 1, 1]} : vector<4x16x32xf32> to vector<1x16x32xf32>
    %65 = vector.shape_cast %64 : vector<1x16x32xf32> to vector<16x32xf32>
    %66 = arith.addf %63, %65 : vector<16x32xf32>
    %67 = vector.extract_strided_slice %61 {offsets = [2, 0, 0], sizes = [1, 16, 32], strides = [1, 1, 1]} : vector<4x16x32xf32> to vector<1x16x32xf32>
    %68 = vector.shape_cast %67 : vector<1x16x32xf32> to vector<16x32xf32>
    %69 = arith.addf %66, %68 : vector<16x32xf32>
    %70 = vector.extract_strided_slice %61 {offsets = [3, 0, 0], sizes = [1, 16, 32], strides = [1, 1, 1]} : vector<4x16x32xf32> to vector<1x16x32xf32>
    %71 = vector.shape_cast %70 : vector<1x16x32xf32> to vector<16x32xf32>
    %72 = arith.addf %69, %71 : vector<16x32xf32>
    %c0_39 = arith.constant 0 : index
    %c0_40 = arith.constant 0 : index
    %73 = vector.load %arg10[%c0_39, %c0_40] : memref<1x32xf32, #tpu.memory_space<vmem>>, vector<1x32xf32>
    %74 = vector.broadcast %73 : vector<1x32xf32> to vector<16x32xf32>
    %75 = arith.addf %72, %74 : vector<16x32xf32>
    %76 = arith.addf %4, %75 : vector<16x32xf32>
    %cst_41 = arith.constant dense<0.000000e+00> : vector<16xf32>
    %77 = vector.multi_reduction <add>, %76, %cst_41 [1] : vector<16x32xf32> to vector<16xf32>
    %78 = vector.shape_cast %77 : vector<16xf32> to vector<16x1xf32>
    %cst_42 = arith.constant 3.200000e+01 : f32
    %79 = vector.broadcast %cst_42 : f32 to vector<16x1xf32>
    %80 = arith.divf %78, %79 : vector<16x1xf32>
    %81 = vector.broadcast %80 : vector<16x1xf32> to vector<16x32xf32>
    %82 = arith.subf %76, %81 : vector<16x32xf32>
    %83 = arith.mulf %82, %82 : vector<16x32xf32>
    %cst_43 = arith.constant dense<0.000000e+00> : vector<16xf32>
    %84 = vector.multi_reduction <add>, %83, %cst_43 [1] : vector<16x32xf32> to vector<16xf32>
    %85 = vector.shape_cast %84 : vector<16xf32> to vector<16x1xf32>
    %cst_44 = arith.constant 0.0322580636 : f32
    %86 = vector.broadcast %cst_44 : f32 to vector<16x1xf32>
    %87 = arith.mulf %85, %86 : vector<16x1xf32>
    %88 = math.sqrt %87 : vector<16x1xf32>
    %cst_45 = arith.constant 9.99999997E-7 : f32
    %89 = vector.broadcast %cst_45 : f32 to vector<16x1xf32>
    %90 = arith.addf %88, %89 : vector<16x1xf32>
    %91 = tpu.reciprocal %90 : vector<16x1xf32> -> vector<16x1xf32>
    %c0_46 = arith.constant 0 : index
    %c0_47 = arith.constant 0 : index
    %92 = vector.load %arg15[%c0_46, %c0_47] : memref<1x32xf32, #tpu.memory_space<vmem>>, vector<1x32xf32>
    %93 = vector.broadcast %80 : vector<16x1xf32> to vector<16x32xf32>
    %94 = arith.subf %76, %93 : vector<16x32xf32>
    %95 = vector.broadcast %91 : vector<16x1xf32> to vector<16x32xf32>
    %96 = arith.mulf %94, %95 : vector<16x32xf32>
    %97 = vector.broadcast %92 : vector<1x32xf32> to vector<16x32xf32>
    %98 = arith.mulf %97, %96 : vector<16x32xf32>
    %c0_48 = arith.constant 0 : index
    %c0_49 = arith.constant 0 : index
    %99 = vector.load %arg16[%c0_48, %c0_49] : memref<1x32xf32, #tpu.memory_space<vmem>>, vector<1x32xf32>
    %100 = vector.broadcast %99 : vector<1x32xf32> to vector<16x32xf32>
    %101 = arith.addf %98, %100 : vector<16x32xf32>
    %102 = arith.truncf %101 : vector<16x32xf32> to vector<16x32xbf16>
    %c0_50 = arith.constant 0 : index
    %c0_51 = arith.constant 0 : index
    %103 = vector.load %arg11[%c0_50, %c0_51] : memref<32x128xbf16, #tpu.memory_space<vmem>>, vector<32x128xbf16>
    %cst_52 = arith.constant dense<0.000000e+00> : vector<16x128xf32>
    %104 = tpu.matmul %102, %103, %cst_52 {dimension_numbers = #tpu.dot_dimension_numbers<[1], [0], [0], [1], [0, 0, 1, 1], [], []>} : vector<16x32xbf16>, vector<32x128xbf16>, vector<16x128xf32> -> vector<16x128xf32>
    %c0_53 = arith.constant 0 : index
    %c0_54 = arith.constant 0 : index
    %105 = vector.load %arg12[%c0_53, %c0_54] : memref<1x128xf32, #tpu.memory_space<vmem>>, vector<1x128xf32>
    %106 = vector.broadcast %105 : vector<1x128xf32> to vector<16x128xf32>
    %107 = arith.addf %104, %106 : vector<16x128xf32>
    %cst_55 = arith.constant 0.000000e+00 : f32
    %108 = vector.broadcast %cst_55 : f32 to vector<16x128xf32>
    %109 = arith.maximumf %107, %108 : vector<16x128xf32>
    %110 = arith.truncf %109 : vector<16x128xf32> to vector<16x128xbf16>
    %c0_56 = arith.constant 0 : index
    %c0_57 = arith.constant 0 : index
    %111 = vector.load %arg13[%c0_56, %c0_57] : memref<128x32xbf16, #tpu.memory_space<vmem>>, vector<128x32xbf16>
    %cst_58 = arith.constant dense<0.000000e+00> : vector<16x32xf32>
    %112 = tpu.matmul %110, %111, %cst_58 {dimension_numbers = #tpu.dot_dimension_numbers<[1], [0], [0], [1], [0, 0, 1, 1], [], []>} : vector<16x128xbf16>, vector<128x32xbf16>, vector<16x32xf32> -> vector<16x32xf32>
    %c0_59 = arith.constant 0 : index
    %c0_60 = arith.constant 0 : index
    %113 = vector.load %arg14[%c0_59, %c0_60] : memref<1x32xf32, #tpu.memory_space<vmem>>, vector<1x32xf32>
    %114 = vector.broadcast %113 : vector<1x32xf32> to vector<16x32xf32>
    %115 = arith.addf %112, %114 : vector<16x32xf32>
    %116 = arith.addf %101, %115 : vector<16x32xf32>
    %cst_61 = arith.constant dense<0.000000e+00> : vector<16xf32>
    %117 = vector.multi_reduction <add>, %116, %cst_61 [1] : vector<16x32xf32> to vector<16xf32>
    %118 = vector.shape_cast %117 : vector<16xf32> to vector<16x1xf32>
    %cst_62 = arith.constant 3.200000e+01 : f32
    %119 = vector.broadcast %cst_62 : f32 to vector<16x1xf32>
    %120 = arith.divf %118, %119 : vector<16x1xf32>
    %121 = vector.broadcast %120 : vector<16x1xf32> to vector<16x32xf32>
    %122 = arith.subf %116, %121 : vector<16x32xf32>
    %123 = arith.mulf %122, %122 : vector<16x32xf32>
    %cst_63 = arith.constant dense<0.000000e+00> : vector<16xf32>
    %124 = vector.multi_reduction <add>, %123, %cst_63 [1] : vector<16x32xf32> to vector<16xf32>
    %125 = vector.shape_cast %124 : vector<16xf32> to vector<16x1xf32>
    %cst_64 = arith.constant 0.0322580636 : f32
    %126 = vector.broadcast %cst_64 : f32 to vector<16x1xf32>
    %127 = arith.mulf %125, %126 : vector<16x1xf32>
    %128 = math.sqrt %127 : vector<16x1xf32>
    %cst_65 = arith.constant 9.99999997E-7 : f32
    %129 = vector.broadcast %cst_65 : f32 to vector<16x1xf32>
    %130 = arith.addf %128, %129 : vector<16x1xf32>
    %131 = tpu.reciprocal %130 : vector<16x1xf32> -> vector<16x1xf32>
    %c0_66 = arith.constant 0 : index
    %c0_67 = arith.constant 0 : index
    %132 = vector.load %arg17[%c0_66, %c0_67] : memref<1x32xf32, #tpu.memory_space<vmem>>, vector<1x32xf32>
    %133 = vector.broadcast %120 : vector<16x1xf32> to vector<16x32xf32>
    %134 = arith.subf %116, %133 : vector<16x32xf32>
    %135 = vector.broadcast %131 : vector<16x1xf32> to vector<16x32xf32>
    %136 = arith.mulf %134, %135 : vector<16x32xf32>
    %137 = vector.broadcast %132 : vector<1x32xf32> to vector<16x32xf32>
    %138 = arith.mulf %137, %136 : vector<16x32xf32>
    %c0_68 = arith.constant 0 : index
    %c0_69 = arith.constant 0 : index
    %139 = vector.load %arg18[%c0_68, %c0_69] : memref<1x32xf32, #tpu.memory_space<vmem>>, vector<1x32xf32>
    %140 = vector.broadcast %139 : vector<1x32xf32> to vector<16x32xf32>
    %141 = arith.addf %138, %140 : vector<16x32xf32>
    %c0_70 = arith.constant 0 : index
    %c0_71 = arith.constant 0 : index
    %c0_72 = arith.constant 0 : index
    %142 = vector.load %arg19[%c0_70, %c0_71, %c0_72] : memref<1x16x32xf32, #tpu.memory_space<vmem>>, vector<1x16x32xf32>
    %143 = vector.shape_cast %142 : vector<1x16x32xf32> to vector<16x32xf32>
    %144 = vector.shape_cast %141 : vector<16x32xf32> to vector<1x16x32xf32>
    tpu.vector_store %arg19[%c0_70, %c0_71, %c0_72], %144 {strides = array<i32>} : memref<1x16x32xf32, #tpu.memory_space<vmem>>, vector<1x16x32xf32>,
    return
  }
  func.func @transform_0(%arg0: i32, %arg1: i32) -> (i32, i32, i32) {
    %c0_i32 = arith.constant 0 : i32
    %c0_i32_0 = arith.constant 0 : i32
    return %arg0, %arg1, %c0_i32 : i32, i32, i32
  }
  func.func @transform_1(%arg0: i32, %arg1: i32) -> (i32, i32, i32) {
    %c0_i32 = arith.constant 0 : i32
    %c0_i32_0 = arith.constant 0 : i32
    %c0_i32_1 = arith.constant 0 : i32
    return %arg0, %c0_i32, %c0_i32_0 : i32, i32, i32
  }
  func.func @transform_2(%arg0: i32, %arg1: i32) -> (i32, i32, i32) {
    %c0_i32 = arith.constant 0 : i32
    %c0_i32_0 = arith.constant 0 : i32
    return %arg0, %arg1, %c0_i32 : i32, i32, i32
  }
  func.func @transform_3(%arg0: i32, %arg1: i32) -> (i32, i32) {
    %c0_i32 = arith.constant 0 : i32
    %c0_i32_0 = arith.constant 0 : i32
    %c0_i32_1 = arith.constant 0 : i32
    return %c0_i32, %c0_i32_0 : i32, i32
  }
  func.func @transform_4(%arg0: i32, %arg1: i32) -> (i32, i32) {
    %c0_i32 = arith.constant 0 : i32
    %c0_i32_0 = arith.constant 0 : i32
    %c0_i32_1 = arith.constant 0 : i32
    return %c0_i32, %c0_i32_0 : i32, i32
  }
  func.func @transform_5(%arg0: i32, %arg1: i32) -> (i32, i32) {
    %c0_i32 = arith.constant 0 : i32
    %c0_i32_0 = arith.constant 0 : i32
    %c0_i32_1 = arith.constant 0 : i32
    return %c0_i32, %c0_i32_0 : i32, i32
  }
  func.func @transform_6(%arg0: i32, %arg1: i32) -> (i32, i32) {
    %c0_i32 = arith.constant 0 : i32
    %c0_i32_0 = arith.constant 0 : i32
    %c0_i32_1 = arith.constant 0 : i32
    return %c0_i32, %c0_i32_0 : i32, i32
  }
  func.func @transform_7(%arg0: i32, %arg1: i32) -> (i32, i32, i32) {
    %c0_i32 = arith.constant 0 : i32
    %c0_i32_0 = arith.constant 0 : i32
    %c0_i32_1 = arith.constant 0 : i32
    %c0_i32_2 = arith.constant 0 : i32
    return %c0_i32, %c0_i32_0, %c0_i32_1 : i32, i32, i32
  }
  func.func @transform_8(%arg0: i32, %arg1: i32) -> (i32, i32) {
    %c0_i32 = arith.constant 0 : i32
    %c0_i32_0 = arith.constant 0 : i32
    %c0_i32_1 = arith.constant 0 : i32
    return %c0_i32, %c0_i32_0 : i32, i32
  }
  func.func @transform_9(%arg0: i32, %arg1: i32) -> (i32, i32) {
    %c0_i32 = arith.constant 0 : i32
    %c0_i32_0 = arith.constant 0 : i32
    %c0_i32_1 = arith.constant 0 : i32
    return %c0_i32, %c0_i32_0 : i32, i32
  }
  func.func @transform_10(%arg0: i32, %arg1: i32) -> (i32, i32) {
    %c0_i32 = arith.constant 0 : i32
    %c0_i32_0 = arith.constant 0 : i32
    %c0_i32_1 = arith.constant 0 : i32
    return %c0_i32, %c0_i32_0 : i32, i32
  }
  func.func @transform_11(%arg0: i32, %arg1: i32) -> (i32, i32) {
    %c0_i32 = arith.constant 0 : i32
    %c0_i32_0 = arith.constant 0 : i32
    %c0_i32_1 = arith.constant 0 : i32
    return %c0_i32, %c0_i32_0 : i32, i32
  }
  func.func @transform_12(%arg0: i32, %arg1: i32) -> (i32, i32) {
    %c0_i32 = arith.constant 0 : i32
    %c0_i32_0 = arith.constant 0 : i32
    %c0_i32_1 = arith.constant 0 : i32
    return %c0_i32, %c0_i32_0 : i32, i32
  }
  func.func @transform_13(%arg0: i32, %arg1: i32) -> (i32, i32) {
    %c0_i32 = arith.constant 0 : i32
    %c0_i32_0 = arith.constant 0 : i32
    %c0_i32_1 = arith.constant 0 : i32
    return %c0_i32, %c0_i32_0 : i32, i32
  }
  func.func @transform_14(%arg0: i32, %arg1: i32) -> (i32, i32) {
    %c0_i32 = arith.constant 0 : i32
    %c0_i32_0 = arith.constant 0 : i32
    %c0_i32_1 = arith.constant 0 : i32
    return %c0_i32, %c0_i32_0 : i32, i32
  }
  func.func @transform_15(%arg0: i32, %arg1: i32) -> (i32, i32) {
    %c0_i32 = arith.constant 0 : i32
    %c0_i32_0 = arith.constant 0 : i32
    %c0_i32_1 = arith.constant 0 : i32
    return %c0_i32, %c0_i32_0 : i32, i32
  }
  func.func @transform_16(%arg0: i32, %arg1: i32) -> (i32, i32) {
    %c0_i32 = arith.constant 0 : i32
    %c0_i32_0 = arith.constant 0 : i32
    %c0_i32_1 = arith.constant 0 : i32
    return %c0_i32, %c0_i32_0 : i32, i32
  }
  func.func @transform_17(%arg0: i32, %arg1: i32) -> (i32, i32, i32) {
    %c0_i32 = arith.constant 0 : i32
    %c0_i32_0 = arith.constant 0 : i32
    return %arg0, %arg1, %c0_i32 : i32, i32, i32
  }
}

</mosaic_0001>

<llo_original>
// kernel: tpu_custom_call.1
$region0: #{tpu_custom_call.1}
  #allocation0 [shape = 'u32[]', space=smem, size = 0x4, offset = 0x4, fixed_abs, tag = 'smem constant byte address 0x4 - core index']
  #allocation1 [shape = 'u32[144,128]{1,0:T(1,128)}', space=vmem, size = 0x12000, scoped, tag = 'internal scratch']
  #allocation2 [shape = 'bf16[4,32,8]{2,1,0:T(16,128)(2,1)}', space=vmem, size = 0x8000, scoped, tag = 'scratch operand']
  #allocation3 [shape = 'bf16[4,32,8]{2,1,0:T(16,128)(2,1)}', space=vmem, size = 0x8000, scoped, tag = 'scratch operand']
  #allocation4 [shape = 'bf16[4,16,8]{2,1,0:T(16,128)(2,1)}', space=vmem, size = 0x4000, scoped, tag = 'scratch operand']
  %s0 = inlined_call_operand.vmem [shape: f32[2,32,32], index: 0, kind: input, shape index: {}]
  %s1 = inlined_call_operand.hbm [shape: f32[2,32,32], index: 1, kind: input, shape index: {}]
  %s2 = inlined_call_operand.hbm [shape: bf16[2,32,32], index: 2, kind: input, shape index: {}]
  %s3 = inlined_call_operand.vmem [shape: bf16[32,32], index: 3, kind: input, shape index: {}]
  %s4 = inlined_call_operand.vmem [shape: f32[1,32], index: 4, kind: input, shape index: {}]
  %s5 = inlined_call_operand.hbm [shape: bf16[32,64], index: 5, kind: input, shape index: {}]
  %s6 = inlined_call_operand.vmem [shape: f32[1,64], index: 6, kind: input, shape index: {}]
  %s7 = inlined_call_operand.hbm [shape: bf16[4,8,32], index: 7, kind: input, shape index: {}]
  %s8 = inlined_call_operand.hbm [shape: f32[1,32], index: 8, kind: input, shape index: {}]
  %s9 = inlined_call_operand.vmem [shape: bf16[32,128], index: 9, kind: input, shape index: {}]
  %s10 = inlined_call_operand.vmem [shape: f32[1,128], index: 10, kind: input, shape index: {}]
  %s11 = inlined_call_operand.vmem [shape: bf16[128,32], index: 11, kind: input, shape index: {}]
  %s12 = inlined_call_operand.vmem [shape: f32[1,32], index: 12, kind: input, shape index: {}]
  %s13 = inlined_call_operand.vmem [shape: f32[1,32], index: 13, kind: input, shape index: {}]
  %s14 = inlined_call_operand.vmem [shape: f32[1,32], index: 14, kind: input, shape index: {}]
  %s15 = inlined_call_operand.vmem [shape: f32[1,32], index: 15, kind: input, shape index: {}]
  %s16 = inlined_call_operand.vmem [shape: f32[1,32], index: 16, kind: input, shape index: {}]
  %s17 = inlined_call_operand.hbm [shape: f32[2,32,32], index: 17, kind: output, shape index: {}]
  %s18 = sld [smem:[#allocation0]]
  $region125: #{tpu_custom_call.1} parent=0
    _
  %s20 = ssub.s32 1, %s18
  %s21 = scalar_select 0, %s20, %s18
  $region1: #{tpu_custom_call.1} parent=0
    #allocation5 [shape = 'u8[32768]{0}', space=vmem, size = 0x8000, scoped, tag = 'input window, operand 1']
    #allocation6 [shape = 's32[2]{0}', space=sflag, size = 0x8, scoped, tag = 'scoped memory for tpu_custom_call.1']
    #allocation7 [shape = 's32[2]{0}', space=sflag, size = 0x8, scoped, tag = 'scoped memory for tpu_custom_call.1']
    #allocation8 [shape = 'u8[8192]{0}', space=vmem, size = 0x2000, scoped, tag = 'input window, operand 2']
    #allocation9 [shape = 's32[2]{0}', space=sflag, size = 0x8, scoped, tag = 'scoped memory for tpu_custom_call.1']
    #allocation10 [shape = 'u8[8192]{0}', space=vmem, size = 0x2000, scoped, tag = 'input window, operand 5, single buffered']
    #allocation11 [shape = 'u8[8192]{0}', space=vmem, size = 0x2000, scoped, tag = 'input window, operand 7, single buffered']
    #allocation12 [shape = 's32[1]{0}', space=sflag, size = 0x4, scoped, tag = 'scoped memory for tpu_custom_call.1']
    #allocation13 [shape = 'u8[512]{0}', space=vmem, size = 0x400, scoped, tag = 'input window, operand 8, single buffered']
    #allocation14 [shape = 'u8[16384]{0}', space=vmem, size = 0x4000, scoped, tag = 'output window, operand 0']
    %22 = vsyncpa [#allocation6], 0
    %s23 = scalar_lea.sflag [#allocation6], 1
    %24 = vsyncpa %s23, 0
    %25 = vsyncpa [#allocation9], 0
    %s26 = scalar_lea.sflag [#allocation9], 1
    %27 = vsyncpa %s26, 0
    %28 = vsyncpa [#allocation12], 0
    %29 = vsyncpa [#allocation7], 0
    %s30 = scalar_lea.sflag [#allocation7], 1
    %31 = vsyncpa %s30, 0
    loop: start=0, step=1, limit=6
    $region2: #{tpu_custom_call.1} parent=1 // loop_pre_header
      _
    $region3: #{tpu_custom_call.1} parent=1 // loop_header
      %s33 = sphi 0, %s37
      %p34 = scmp.ge.s32.totalorder %s33, 6
      %s40 = sphi 0, %s52
      %s41 = sphi 0, %s48
      %s42 = sphi 0, %s40
      %s43 = sphi 0, %s41
      %s44 = sphi 0, %s42
      %s45 = sphi 0, %s43
      %s57 = sphi 0, %s59
      %s60 = sphi 0, %s57
      %s61 = sphi 0, %s60
      %s77 = sphi 0, %s61
      %s83 = sphi 0, %s85
      %s86 = sphi 0, %s83
      %s87 = sphi 0, %s86
      %s103 = sphi 0, %s87
      %s111 = sphi 0, %s113
      %s114 = sphi 0, %s111
      %s115 = sphi 0, %s114
      %s131 = sphi 0, %s115
      %s135 = sphi 0, %s135
      %s137 = sphi 0, %s135
      %s138 = sphi 0, %s137
      %s152 = sphi 0, %s138
      %s156 = sphi 0, %s156
      %s158 = sphi 0, %s156
      %s159 = sphi 0, %s158
      %s173 = sphi 0, %s159
      %s177 = sphi 0, %s177
      %s179 = sphi 0, %s177
      %s180 = sphi 0, %s179
      %s194 = sphi 0, %s180
      %s198 = sphi 0, %s198
      %s200 = sphi 0, %s198
      %s201 = sphi 0, %s200
      %s215 = sphi 0, %s201
      %s219 = sphi 0, %s219
      %s221 = sphi 0, %s219
      %s222 = sphi 0, %s221
      %s236 = sphi 0, %s222
      %s240 = sphi 0, %s240
      %s242 = sphi 0, %s240
      %s243 = sphi 0, %s242
      %s257 = sphi 0, %s243
      %s261 = sphi 0, %s261
      %s263 = sphi 0, %s261
      %s264 = sphi 0, %s263
      %s278 = sphi 0, %s264
      %s282 = sphi 0, %s282
      %s284 = sphi 0, %s282
      %s285 = sphi 0, %s284
      %s299 = sphi 0, %s285
      %s303 = sphi 0, %s303
      %s305 = sphi 0, %s303
      %s306 = sphi 0, %s305
      %s320 = sphi 0, %s306
      %s324 = sphi 0, %s324
      %s326 = sphi 0, %s324
      %s327 = sphi 0, %s326
      %s341 = sphi 0, %s327
      %s345 = sphi 0, %s345
      %s347 = sphi 0, %s345
      %s348 = sphi 0, %s347
      %s362 = sphi 0, %s348
      %s366 = sphi 0, %s366
      %s368 = sphi 0, %s366
      %s369 = sphi 0, %s368
      %s383 = sphi 0, %s369
      %s387 = sphi 0, %s387
      %s389 = sphi 0, %s387
      %s390 = sphi 0, %s389
      %s404 = sphi 0, %s390
      %s408 = sphi 0, %s408
      %s410 = sphi 0, %s408
      %s411 = sphi 0, %s410
      %s425 = sphi 0, %s411
      %s433 = sphi 0, %s435
      %s436 = sphi 0, %s433
      %s437 = sphi 0, %s436
      %s453 = sphi 0, %s437
    $region4: #{tpu_custom_call.1} parent=1 // loop_header_branch
      %36 = sbr.rel (%p34) target = $region8
    $region5: #{tpu_custom_call.1} parent=1 // loop_body
      %s38 = ssub.s32 %s33, 1
      %s39 = ssub.s32 %s33, 2
      %s46 = sadd.s32 1, %s41
      %p47 = scmp.ge.s32.totalorder %s46, 2
      %s48 = scalar_select %p47, 0, %s46
      %s49 = sadd.s32 1, %s40
      %s50 = scalar_select %p47, %s49, %s40
      %p51 = scmp.ge.s32.totalorder %s50, 2
      %s52 = scalar_select %p51, 0, %s50
      %s53 = ssub.s32 %s40, %s52
      %s54 = ssub.s32 %s41, %s48
      %s55 = sor.u32 %s53, %s54
      %p56 = scmp.eq.s32.totalorder %s55, 0
      %s58 = sadd.s32 %s57, 1
      %s59 = scalar_select %p56, %s57, %s58
      %p62 = pneg %p56
      %p63 = scmp.eq.s32.totalorder %s33, 3
      %p64 = por %p62, %p63
      %p65 = scmp.ne.s32.totalorder %s57, %s60
      %p66 = scmp.eq.s32.totalorder %s33, 0
      %p67 = por %p65, %p66
      %p68 = scmp.ne.s32.totalorder %s57, %s60
      %p69 = scmp.eq.s32.totalorder %s38, 3
      %p70 = por %p68, %p69
      %p71 = scmp.ne.s32.totalorder %s60, %s61
      %p72 = scmp.eq.s32.totalorder %s38, 0
      %p73 = por %p71, %p72
      %p74 = scmp.ne.s32.totalorder %s60, %s61
      %p75 = scmp.eq.s32.totalorder %s39, 3
      %p76 = por %p74, %p75
      %p78 = scmp.ne.s32.totalorder %s61, %s77
      %p79 = scmp.eq.s32.totalorder %s39, 0
      %p80 = por %p78, %p79
      %s81 = ssub.s32 %s40, %s52
      %p82 = scmp.eq.s32.totalorder %s81, 0
      %s84 = sadd.s32 %s83, 1
      %s85 = scalar_select %p82, %s83, %s84
      %p88 = pneg %p82
      %p89 = scmp.eq.s32.totalorder %s33, 3
      %p90 = por %p88, %p89
      %p91 = scmp.ne.s32.totalorder %s83, %s86
      %p92 = scmp.eq.s32.totalorder %s33, 0
      %p93 = por %p91, %p92
      %p94 = scmp.ne.s32.totalorder %s83, %s86
      %p95 = scmp.eq.s32.totalorder %s38, 3
      %p96 = por %p94, %p95
      %p97 = scmp.ne.s32.totalorder %s86, %s87
      %p98 = scmp.eq.s32.totalorder %s38, 0
      %p99 = por %p97, %p98
      %p100 = scmp.ne.s32.totalorder %s86, %s87
      %p101 = scmp.eq.s32.totalorder %s39, 3
      %p102 = por %p100, %p101
      %p104 = scmp.ne.s32.totalorder %s87, %s103
      %p105 = scmp.eq.s32.totalorder %s39, 0
      %p106 = por %p104, %p105
      %s107 = ssub.s32 %s40, %s52
      %s108 = ssub.s32 %s41, %s48
      %s109 = sor.u32 %s107, %s108
      %p110 = scmp.eq.s32.totalorder %s109, 0
      %s112 = sadd.s32 %s111, 1
      %s113 = scalar_select %p110, %s111, %s112
      %p116 = pneg %p110
      %p117 = scmp.eq.s32.totalorder %s33, 3
      %p118 = por %p116, %p117
      %p119 = scmp.ne.s32.totalorder %s111, %s114
      %p120 = scmp.eq.s32.totalorder %s33, 0
      %p121 = por %p119, %p120
      %p122 = scmp.ne.s32.totalorder %s111, %s114
      %p123 = scmp.eq.s32.totalorder %s38, 3
      %p124 = por %p122, %p123
      %p125 = scmp.ne.s32.totalorder %s114, %s115
      %p126 = scmp.eq.s32.totalorder %s38, 0
      %p127 = por %p125, %p126
      %p128 = scmp.ne.s32.totalorder %s114, %s115
      %p129 = scmp.eq.s32.totalorder %s39, 3
      %p130 = por %p128, %p129
      %p132 = scmp.ne.s32.totalorder %s115, %s131
      %p133 = scmp.eq.s32.totalorder %s39, 0
      %p134 = por %p132, %p133
      %s136 = sadd.s32 %s135, 1
      %p139 = scmp.eq.s32.totalorder %s33, 3
      %p140 = scmp.ne.s32.totalorder %s135, %s137
      %p141 = scmp.eq.s32.totalorder %s33, 0
      %p142 = por %p140, %p141
      %p143 = scmp.ne.s32.totalorder %s135, %s137
      %p144 = scmp.eq.s32.totalorder %s38, 3
      %p145 = por %p143, %p144
      %p146 = scmp.ne.s32.totalorder %s137, %s138
      %p147 = scmp.eq.s32.totalorder %s38, 0
      %p148 = por %p146, %p147
      %p149 = scmp.ne.s32.totalorder %s137, %s138
      %p150 = scmp.eq.s32.totalorder %s39, 3
      %p151 = por %p149, %p150
      %p153 = scmp.ne.s32.totalorder %s138, %s152
      %p154 = scmp.eq.s32.totalorder %s39, 0
      %p155 = por %p153, %p154
      %s157 = sadd.s32 %s156, 1
      %p160 = scmp.eq.s32.totalorder %s33, 3
      %p161 = scmp.ne.s32.totalorder %s156, %s158
      %p162 = scmp.eq.s32.totalorder %s33, 0
      %p163 = por %p161, %p162
      %p164 = scmp.ne.s32.totalorder %s156, %s158
      %p165 = scmp.eq.s32.totalorder %s38, 3
      %p166 = por %p164, %p165
      %p167 = scmp.ne.s32.totalorder %s158, %s159
      %p168 = scmp.eq.s32.totalorder %s38, 0
      %p169 = por %p167, %p168
      %p170 = scmp.ne.s32.totalorder %s158, %s159
      %p171 = scmp.eq.s32.totalorder %s39, 3
      %p172 = por %p170, %p171
      %p174 = scmp.ne.s32.totalorder %s159, %s173
      %p175 = scmp.eq.s32.totalorder %s39, 0
      %p176 = por %p174, %p175
      %s178 = sadd.s32 %s177, 1
      %p181 = scmp.eq.s32.totalorder %s33, 3
      %p182 = scmp.ne.s32.totalorder %s177, %s179
      %p183 = scmp.eq.s32.totalorder %s33, 0
      %p184 = por %p182, %p183
      %p185 = scmp.ne.s32.totalorder %s177, %s179
      %p186 = scmp.eq.s32.totalorder %s38, 3
      %p187 = por %p185, %p186
      %p188 = scmp.ne.s32.totalorder %s179, %s180
      %p189 = scmp.eq.s32.totalorder %s38, 0
      %p190 = por %p188, %p189
      %p191 = scmp.ne.s32.totalorder %s179, %s180
      %p192 = scmp.eq.s32.totalorder %s39, 3
      %p193 = por %p191, %p192
      %p195 = scmp.ne.s32.totalorder %s180, %s194
      %p196 = scmp.eq.s32.totalorder %s39, 0
      %p197 = por %p195, %p196
      %s199 = sadd.s32 %s198, 1
      %p202 = scmp.eq.s32.totalorder %s33, 3
      %p203 = scmp.ne.s32.totalorder %s198, %s200
      %p204 = scmp.eq.s32.totalorder %s33, 0
      %p205 = por %p203, %p204
      %p206 = scmp.ne.s32.totalorder %s198, %s200
      %p207 = scmp.eq.s32.totalorder %s38, 3
      %p208 = por %p206, %p207
      %p209 = scmp.ne.s32.totalorder %s200, %s201
      %p210 = scmp.eq.s32.totalorder %s38, 0
      %p211 = por %p209, %p210
      %p212 = scmp.ne.s32.totalorder %s200, %s201
      %p213 = scmp.eq.s32.totalorder %s39, 3
      %p214 = por %p212, %p213
      %p216 = scmp.ne.s32.totalorder %s201, %s215
      %p217 = scmp.eq.s32.totalorder %s39, 0
      %p218 = por %p216, %p217
      %s220 = sadd.s32 %s219, 1
      %p223 = scmp.eq.s32.totalorder %s33, 3
      %p224 = scmp.ne.s32.totalorder %s219, %s221
      %p225 = scmp.eq.s32.totalorder %s33, 0
      %p226 = por %p224, %p225
      %p227 = scmp.ne.s32.totalorder %s219, %s221
      %p228 = scmp.eq.s32.totalorder %s38, 3
      %p229 = por %p227, %p228
      %p230 = scmp.ne.s32.totalorder %s221, %s222
      %p231 = scmp.eq.s32.totalorder %s38, 0
      %p232 = por %p230, %p231
      %p233 = scmp.ne.s32.totalorder %s221, %s222
      %p234 = scmp.eq.s32.totalorder %s39, 3
      %p235 = por %p233, %p234
      %p237 = scmp.ne.s32.totalorder %s222, %s236
      %p238 = scmp.eq.s32.totalorder %s39, 0
      %p239 = por %p237, %p238
      %s241 = sadd.s32 %s240, 1
      %p244 = scmp.eq.s32.totalorder %s33, 3
      %p245 = scmp.ne.s32.totalorder %s240, %s242
      %p246 = scmp.eq.s32.totalorder %s33, 0
      %p247 = por %p245, %p246
      %p248 = scmp.ne.s32.totalorder %s240, %s242
      %p249 = scmp.eq.s32.totalorder %s38, 3
      %p250 = por %p248, %p249
      %p251 = scmp.ne.s32.totalorder %s242, %s243
      %p252 = scmp.eq.s32.totalorder %s38, 0
      %p253 = por %p251, %p252
      %p254 = scmp.ne.s32.totalorder %s242, %s243
      %p255 = scmp.eq.s32.totalorder %s39, 3
      %p256 = por %p254, %p255
      %p258 = scmp.ne.s32.totalorder %s243, %s257
      %p259 = scmp.eq.s32.totalorder %s39, 0
      %p260 = por %p258, %p259
      %s262 = sadd.s32 %s261, 1
      %p265 = scmp.eq.s32.totalorder %s33, 3
      %p266 = scmp.ne.s32.totalorder %s261, %s263
      %p267 = scmp.eq.s32.totalorder %s33, 0
      %p268 = por %p266, %p267
      %p269 = scmp.ne.s32.totalorder %s261, %s263
      %p270 = scmp.eq.s32.totalorder %s38, 3
      %p271 = por %p269, %p270
      %p272 = scmp.ne.s32.totalorder %s263, %s264
      %p273 = scmp.eq.s32.totalorder %s38, 0
      %p274 = por %p272, %p273
      %p275 = scmp.ne.s32.totalorder %s263, %s264
      %p276 = scmp.eq.s32.totalorder %s39, 3
      %p277 = por %p275, %p276
      %p279 = scmp.ne.s32.totalorder %s264, %s278
      %p280 = scmp.eq.s32.totalorder %s39, 0
      %p281 = por %p279, %p280
      %s283 = sadd.s32 %s282, 1
      %p286 = scmp.eq.s32.totalorder %s33, 3
      %p287 = scmp.ne.s32.totalorder %s282, %s284
      %p288 = scmp.eq.s32.totalorder %s33, 0
      %p289 = por %p287, %p288
      %p290 = scmp.ne.s32.totalorder %s282, %s284
      %p291 = scmp.eq.s32.totalorder %s38, 3
      %p292 = por %p290, %p291
      %p293 = scmp.ne.s32.totalorder %s284, %s285
      %p294 = scmp.eq.s32.totalorder %s38, 0
      %p295 = por %p293, %p294
      %p296 = scmp.ne.s32.totalorder %s284, %s285
      %p297 = scmp.eq.s32.totalorder %s39, 3
      %p298 = por %p296, %p297
      %p300 = scmp.ne.s32.totalorder %s285, %s299
      %p301 = scmp.eq.s32.totalorder %s39, 0
      %p302 = por %p300, %p301
      %s304 = sadd.s32 %s303, 1
      %p307 = scmp.eq.s32.totalorder %s33, 3
      %p308 = scmp.ne.s32.totalorder %s303, %s305
      %p309 = scmp.eq.s32.totalorder %s33, 0
      %p310 = por %p308, %p309
      %p311 = scmp.ne.s32.totalorder %s303, %s305
      %p312 = scmp.eq.s32.totalorder %s38, 3
      %p313 = por %p311, %p312
      %p314 = scmp.ne.s32.totalorder %s305, %s306
      %p315 = scmp.eq.s32.totalorder %s38, 0
      %p316 = por %p314, %p315
      %p317 = scmp.ne.s32.totalorder %s305, %s306
      %p318 = scmp.eq.s32.totalorder %s39, 3
      %p319 = por %p317, %p318
      %p321 = scmp.ne.s32.totalorder %s306, %s320
      %p322 = scmp.eq.s32.totalorder %s39, 0
      %p323 = por %p321, %p322
      %s325 = sadd.s32 %s324, 1
      %p328 = scmp.eq.s32.totalorder %s33, 3
      %p329 = scmp.ne.s32.totalorder %s324, %s326
      %p330 = scmp.eq.s32.totalorder %s33, 0
      %p331 = por %p329, %p330
      %p332 = scmp.ne.s32.totalorder %s324, %s326
      %p333 = scmp.eq.s32.totalorder %s38, 3
      %p334 = por %p332, %p333
      %p335 = scmp.ne.s32.totalorder %s326, %s327
      %p336 = scmp.eq.s32.totalorder %s38, 0
      %p337 = por %p335, %p336
      %p338 = scmp.ne.s32.totalorder %s326, %s327
      %p339 = scmp.eq.s32.totalorder %s39, 3
      %p340 = por %p338, %p339
      %p342 = scmp.ne.s32.totalorder %s327, %s341
      %p343 = scmp.eq.s32.totalorder %s39, 0
      %p344 = por %p342, %p343
      %s346 = sadd.s32 %s345, 1
      %p349 = scmp.eq.s32.totalorder %s33, 3
      %p350 = scmp.ne.s32.totalorder %s345, %s347
      %p351 = scmp.eq.s32.totalorder %s33, 0
      %p352 = por %p350, %p351
      %p353 = scmp.ne.s32.totalorder %s345, %s347
      %p354 = scmp.eq.s32.totalorder %s38, 3
      %p355 = por %p353, %p354
      %p356 = scmp.ne.s32.totalorder %s347, %s348
      %p357 = scmp.eq.s32.totalorder %s38, 0
      %p358 = por %p356, %p357
      %p359 = scmp.ne.s32.totalorder %s347, %s348
      %p360 = scmp.eq.s32.totalorder %s39, 3
      %p361 = por %p359, %p360
      %p363 = scmp.ne.s32.totalorder %s348, %s362
      %p364 = scmp.eq.s32.totalorder %s39, 0
      %p365 = por %p363, %p364
      %s367 = sadd.s32 %s366, 1
      %p370 = scmp.eq.s32.totalorder %s33, 3
      %p371 = scmp.ne.s32.totalorder %s366, %s368
      %p372 = scmp.eq.s32.totalorder %s33, 0
      %p373 = por %p371, %p372
      %p374 = scmp.ne.s32.totalorder %s366, %s368
      %p375 = scmp.eq.s32.totalorder %s38, 3
      %p376 = por %p374, %p375
      %p377 = scmp.ne.s32.totalorder %s368, %s369
      %p378 = scmp.eq.s32.totalorder %s38, 0
      %p379 = por %p377, %p378
      %p380 = scmp.ne.s32.totalorder %s368, %s369
      %p381 = scmp.eq.s32.totalorder %s39, 3
      %p382 = por %p380, %p381
      %p384 = scmp.ne.s32.totalorder %s369, %s383
      %p385 = scmp.eq.s32.totalorder %s39, 0
      %p386 = por %p384, %p385
      %s388 = sadd.s32 %s387, 1
      %p391 = scmp.eq.s32.totalorder %s33, 3
      %p392 = scmp.ne.s32.totalorder %s387, %s389
      %p393 = scmp.eq.s32.totalorder %s33, 0
      %p394 = por %p392, %p393
      %p395 = scmp.ne.s32.totalorder %s387, %s389
      %p396 = scmp.eq.s32.totalorder %s38, 3
      %p397 = por %p395, %p396
      %p398 = scmp.ne.s32.totalorder %s389, %s390
      %p399 = scmp.eq.s32.totalorder %s38, 0
      %p400 = por %p398, %p399
      %p401 = scmp.ne.s32.totalorder %s389, %s390
      %p402 = scmp.eq.s32.totalorder %s39, 3
      %p403 = por %p401, %p402
      %p405 = scmp.ne.s32.totalorder %s390, %s404
      %p406 = scmp.eq.s32.totalorder %s39, 0
      %p407 = por %p405, %p406
      %s409 = sadd.s32 %s408, 1
      %p412 = scmp.eq.s32.totalorder %s33, 3
      %p413 = scmp.ne.s32.totalorder %s408, %s410
      %p414 = scmp.eq.s32.totalorder %s33, 0
      %p415 = por %p413, %p414
      %p416 = scmp.ne.s32.totalorder %s408, %s410
      %p417 = scmp.eq.s32.totalorder %s38, 3
      %p418 = por %p416, %p417
      %p419 = scmp.ne.s32.totalorder %s410, %s411
      %p420 = scmp.eq.s32.totalorder %s38, 0
      %p421 = por %p419, %p420
      %p422 = scmp.ne.s32.totalorder %s410, %s411
      %p423 = scmp.eq.s32.totalorder %s39, 3
      %p424 = por %p422, %p423
      %p426 = scmp.ne.s32.totalorder %s411, %s425
      %p427 = scmp.eq.s32.totalorder %s39, 0
      %p428 = por %p426, %p427
      %s429 = ssub.s32 %s40, %s52
      %s430 = ssub.s32 %s41, %s48
      %s431 = sor.u32 %s429, %s430
      %p432 = scmp.eq.s32.totalorder %s431, 0
      %s434 = sadd.s32 %s433, 1
      %s435 = scalar_select %p432, %s433, %s434
      %p438 = pneg %p432
      %p439 = scmp.eq.s32.totalorder %s33, 3
      %p440 = por %p438, %p439
      %p441 = scmp.ne.s32.totalorder %s433, %s436
      %p442 = scmp.eq.s32.totalorder %s33, 0
      %p443 = por %p441, %p442
      %p444 = scmp.ne.s32.totalorder %s433, %s436
      %p445 = scmp.eq.s32.totalorder %s38, 3
      %p446 = por %p444, %p445
      %p447 = scmp.ne.s32.totalorder %s436, %s437
      %p448 = scmp.eq.s32.totalorder %s38, 0
      %p449 = por %p447, %p448
      %p450 = scmp.ne.s32.totalorder %s436, %s437
      %p451 = scmp.eq.s32.totalorder %s39, 3
      %p452 = por %p450, %p451
      %p454 = scmp.ne.s32.totalorder %s437, %s453
      %p455 = scmp.eq.s32.totalorder %s39, 0
      %p456 = por %p454, %p455
      %p457 = scmp.le.s32.totalorder 1, %s33
      %p458 = scmp.lt.s32.totalorder %s33, 5
      %p459 = pnand %p457, %p458
      %p460 = pneg %p459
      // Predicated region
      $region9: #{tpu_custom_call.1} parent=5 // pred_check
        _
      $region10: #{tpu_custom_call.1} parent=5 // pred_check_branch
        %462 = sbr.rel (%p459) target = $region12
      $region11: #{tpu_custom_call.1} parent=5 // pred_region
        %s463 = ssub.s32 %s33, 1
        // Predicated region
        $region13: #{tpu_custom_call.1} parent=11 // pred_check
          %p464 = pneg %p148
        $region14: #{tpu_custom_call.1} parent=11 // pred_check_branch
          %466 = sbr.rel (%p464) target = $region16
        $region15: #{tpu_custom_call.1} parent=11 // pred_region
          _
        $region16: #{tpu_custom_call.1} parent=11 // pred_fallthru
          _
        // Predicated region
        $region17: #{tpu_custom_call.1} parent=11 // pred_check
          %p467 = pneg %p169
        $region18: #{tpu_custom_call.1} parent=11 // pred_check_branch
          %469 = sbr.rel (%p467) target = $region20
        $region19: #{tpu_custom_call.1} parent=11 // pred_region
          _
        $region20: #{tpu_custom_call.1} parent=11 // pred_fallthru
          _
        // Predicated region
        $region21: #{tpu_custom_call.1} parent=11 // pred_check
          %p470 = pneg %p190
        $region22: #{tpu_custom_call.1} parent=11 // pred_check_branch
          %472 = sbr.rel (%p470) target = $region24
        $region23: #{tpu_custom_call.1} parent=11 // pred_region
          %s474 = ssub.s32 256, 256
          %475 = vsyncadd [#allocation9], %s474
          %s476 = sshll.u32 [#allocation10], 4
          %s477 = int_to_ptr.vmem [resolvable:$true] %s476
          %482 = dma.hbm_to_vmem [thread:$0]  %s5, 256, %s477, [#allocation9], 64, 64, 4
        $region24: #{tpu_custom_call.1} parent=11 // pred_fallthru
          _
        // Predicated region
        $region25: #{tpu_custom_call.1} parent=11 // pred_check
          %p483 = pneg %p211
        $region26: #{tpu_custom_call.1} parent=11 // pred_check_branch
          %485 = sbr.rel (%p483) target = $region28
        $region27: #{tpu_custom_call.1} parent=11 // pred_region
          _
        $region28: #{tpu_custom_call.1} parent=11 // pred_fallthru
          _
        // Predicated region
        $region29: #{tpu_custom_call.1} parent=11 // pred_check
          %p486 = pneg %p232
        $region30: #{tpu_custom_call.1} parent=11 // pred_check_branch
          %488 = sbr.rel (%p486) target = $region32
        $region31: #{tpu_custom_call.1} parent=11 // pred_region
          %s490 = ssub.s32 256, 256
          %491 = vsyncadd [#allocation12], %s490
          %s492 = sshll.u32 [#allocation11], 4
          %s493 = int_to_ptr.vmem [resolvable:$true] %s492
          %498 = dma.hbm_to_vmem [thread:$0]  %s7, 256, %s493, [#allocation12], 64, 64, 4
        $region32: #{tpu_custom_call.1} parent=11 // pred_fallthru
          _
        // Predicated region
        $region33: #{tpu_custom_call.1} parent=11 // pred_check
          %p499 = pneg %p253
        $region34: #{tpu_custom_call.1} parent=11 // pred_check_branch
          %501 = sbr.rel (%p499) target = $region36
        $region35: #{tpu_custom_call.1} parent=11 // pred_region
          %s503 = ssub.s32 16, 16
          %504 = vsyncadd [#allocation12], %s503
          %s506 = sshll.u32 [#allocation13], 4
          %s507 = int_to_ptr.vmem [resolvable:$true] %s506
          %509 = dma.hbm_to_vmem [thread:$0]  %s8, 16, %s507, [#allocation12]
        $region36: #{tpu_custom_call.1} parent=11 // pred_fallthru
          _
        // Predicated region
        $region37: #{tpu_custom_call.1} parent=11 // pred_check
          %p510 = pneg %p274
        $region38: #{tpu_custom_call.1} parent=11 // pred_check_branch
          %512 = sbr.rel (%p510) target = $region40
        $region39: #{tpu_custom_call.1} parent=11 // pred_region
          _
        $region40: #{tpu_custom_call.1} parent=11 // pred_fallthru
          _
        // Predicated region
        $region41: #{tpu_custom_call.1} parent=11 // pred_check
          %p513 = pneg %p295
        $region42: #{tpu_custom_call.1} parent=11 // pred_check_branch
          %515 = sbr.rel (%p513) target = $region44
        $region43: #{tpu_custom_call.1} parent=11 // pred_region
          _
        $region44: #{tpu_custom_call.1} parent=11 // pred_fallthru
          _
        // Predicated region
        $region45: #{tpu_custom_call.1} parent=11 // pred_check
          %p516 = pneg %p316
        $region46: #{tpu_custom_call.1} parent=11 // pred_check_branch
          %518 = sbr.rel (%p516) target = $region48
        $region47: #{tpu_custom_call.1} parent=11 // pred_region
          _
        $region48: #{tpu_custom_call.1} parent=11 // pred_fallthru
          _
        // Predicated region
        $region49: #{tpu_custom_call.1} parent=11 // pred_check
          %p519 = pneg %p337
        $region50: #{tpu_custom_call.1} parent=11 // pred_check_branch
          %521 = sbr.rel (%p519) target = $region52
        $region51: #{tpu_custom_call.1} parent=11 // pred_region
          _
        $region52: #{tpu_custom_call.1} parent=11 // pred_fallthru
          _
        // Predicated region
        $region53: #{tpu_custom_call.1} parent=11 // pred_check
          %p522 = pneg %p358
        $region54: #{tpu_custom_call.1} parent=11 // pred_check_branch
          %524 = sbr.rel (%p522) target = $region56
        $region55: #{tpu_custom_call.1} parent=11 // pred_region
          _
        $region56: #{tpu_custom_call.1} parent=11 // pred_fallthru
          _
        // Predicated region
        $region57: #{tpu_custom_call.1} parent=11 // pred_check
          %p525 = pneg %p379
        $region58: #{tpu_custom_call.1} parent=11 // pred_check_branch
          %527 = sbr.rel (%p525) target = $region60
        $region59: #{tpu_custom_call.1} parent=11 // pred_region
          _
        $region60: #{tpu_custom_call.1} parent=11 // pred_fallthru
          _
        // Predicated region
        $region61: #{tpu_custom_call.1} parent=11 // pred_check
          %p528 = pneg %p400
        $region62: #{tpu_custom_call.1} parent=11 // pred_check_branch
          %530 = sbr.rel (%p528) target = $region64
        $region63: #{tpu_custom_call.1} parent=11 // pred_region
          _
        $region64: #{tpu_custom_call.1} parent=11 // pred_fallthru
          _
        // Predicated region
        $region65: #{tpu_custom_call.1} parent=11 // pred_check
          %p531 = pneg %p421
        $region66: #{tpu_custom_call.1} parent=11 // pred_check_branch
          %533 = sbr.rel (%p531) target = $region68
        $region67: #{tpu_custom_call.1} parent=11 // pred_region
          _
        $region68: #{tpu_custom_call.1} parent=11 // pred_fallthru
          _
      $region12: #{tpu_custom_call.1} parent=5 // pred_fallthru
        _
      %p534 = scmp.lt.s32.totalorder %s33, 4
      // Predicated region
      $region69: #{tpu_custom_call.1} parent=5 // pred_check
        %p535 = pneg %p534
      $region70: #{tpu_custom_call.1} parent=5 // pred_check_branch
        %537 = sbr.rel (%p535) target = $region72
      $region71: #{tpu_custom_call.1} parent=5 // pred_region
        // Predicated region
        $region73: #{tpu_custom_call.1} parent=71 // pred_check
          %p538 = pneg %p67
        $region74: #{tpu_custom_call.1} parent=71 // pred_check_branch
          %540 = sbr.rel (%p538) target = $region76
        $region75: #{tpu_custom_call.1} parent=71 // pred_region
          %s541 = smul.u32 2, %s41
          %p542 = scmp.lt.s32.totalorder %s40, 1
          %s543 = scalar_select %p542, %s40, 1
          %p544 = scmp.lt.s32.totalorder %s541, 3
          %s545 = scalar_select %p544, %s541, 3
          %s546 = smul.addr %s543, 4
          %s547 = sadd.s32 %s545, %s546
          %s548 = smul.addr %s547, 8
          %s549 = scalar_lea.vmem %s0, %s548
          %s550 = smul.u32 2, %s41
        $region76: #{tpu_custom_call.1} parent=71 // pred_fallthru
          _
        // Predicated region
        $region77: #{tpu_custom_call.1} parent=71 // pred_check
          %p551 = pneg %p93
        $region78: #{tpu_custom_call.1} parent=71 // pred_check_branch
          %553 = sbr.rel (%p551) target = $region80
        $region79: #{tpu_custom_call.1} parent=71 // pred_region
          %s554 = sand.u32 %s83, 1
          %s555 = scalar_lea.sflag [#allocation6], %s554
          %s556 = sand.u32 %s83, 1
          %s557 = smul.addr %s556, 32
          %s558 = scalar_lea.vmem [#allocation5], %s557
          %s560 = ssub.s32 512, 512
          %561 = vsyncadd %s555, %s560
          %s562 = smul.addr %s40, 4
          %s563 = smul.addr %s562, 128
          %s564 = scalar_lea.hbm %s1, %s563
          %s565 = sshll.u32 %s558, 4
          %s566 = int_to_ptr.vmem [resolvable:$true] %s565
          %571 = dma.hbm_to_vmem [thread:$0]  %s564, 512, %s566, %s555, 128, 128, 8
        $region80: #{tpu_custom_call.1} parent=71 // pred_fallthru
          _
        // Predicated region
        $region81: #{tpu_custom_call.1} parent=71 // pred_check
          %p572 = pneg %p121
        $region82: #{tpu_custom_call.1} parent=71 // pred_check_branch
          %574 = sbr.rel (%p572) target = $region84
        $region83: #{tpu_custom_call.1} parent=71 // pred_region
          %s575 = sand.u32 %s33, 1
          %s576 = scalar_lea.sflag [#allocation9], %s575
          %s577 = sand.u32 %s111, 1
          %s578 = smul.addr %s577, 8
          %s579 = scalar_lea.vmem [#allocation8], %s578
          %s580 = smul.u32 2, %s41
          %s582 = ssub.s32 128, 128
          %583 = vsyncadd %s576, %s582
          %s584 = smul.addr %s40, 4
          %s585 = sadd.s32 %s580, %s584
          %s586 = smul.addr %s585, 64
          %s587 = scalar_lea.hbm %s2, %s586
          %s588 = sshll.u32 %s579, 4
          %s589 = int_to_ptr.vmem [resolvable:$true] %s588
          %594 = dma.hbm_to_vmem [thread:$0]  %s587, 128, %s589, %s576, 64, 64, 4
        $region84: #{tpu_custom_call.1} parent=71 // pred_fallthru
          _
      $region72: #{tpu_custom_call.1} parent=5 // pred_fallthru
        _
      %p595 = scmp.le.s32.totalorder 1, %s33
      %p596 = scmp.lt.s32.totalorder %s33, 5
      %p597 = pnand %p595, %p596
      %p598 = pneg %p597
      // Predicated region
      $region85: #{tpu_custom_call.1} parent=5 // pred_check
        _
      $region86: #{tpu_custom_call.1} parent=5 // pred_check_branch
        %600 = sbr.rel (%p597) target = $region88
      $region87: #{tpu_custom_call.1} parent=5 // pred_region
        %s601 = ssub.s32 %s33, 1
        %s602 = sand.u32 %s86, 1
        %s603 = scalar_lea.sflag [#allocation6], %s602
        %s604 = sand.u32 %s86, 1
        %s605 = smul.addr %s604, 32
        %s606 = scalar_lea.vmem [#allocation5], %s605
        // Predicated region
        $region89: #{tpu_custom_call.1} parent=87 // pred_check
          %p607 = pneg %p99
        $region90: #{tpu_custom_call.1} parent=87 // pred_check_branch
          %609 = sbr.rel (%p607) target = $region92
        $region91: #{tpu_custom_call.1} parent=87 // pred_region
          %610 = dma.done %s603, 512
        $region92: #{tpu_custom_call.1} parent=87 // pred_fallthru
          _
        %s611 = sand.u32 %s38, 1
        %s612 = scalar_lea.sflag [#allocation9], %s611
        %s613 = sand.u32 %s114, 1
        %s614 = smul.addr %s613, 8
        %s615 = scalar_lea.vmem [#allocation8], %s614
        // Predicated region
        $region93: #{tpu_custom_call.1} parent=87 // pred_check
          %p616 = pneg %p127
        $region94: #{tpu_custom_call.1} parent=87 // pred_check_branch
          %618 = sbr.rel (%p616) target = $region96
        $region95: #{tpu_custom_call.1} parent=87 // pred_region
          %619 = dma.done %s612, 128
        $region96: #{tpu_custom_call.1} parent=87 // pred_fallthru
          _
        // Predicated region
        $region97: #{tpu_custom_call.1} parent=87 // pred_check
          %p620 = pneg %p190
        $region98: #{tpu_custom_call.1} parent=87 // pred_check_branch
          %622 = sbr.rel (%p620) target = $region100
        $region99: #{tpu_custom_call.1} parent=87 // pred_region
          %623 = dma.done [#allocation9], 256
        $region100: #{tpu_custom_call.1} parent=87 // pred_fallthru
          _
        // Predicated region
        $region101: #{tpu_custom_call.1} parent=87 // pred_check
          %p624 = pneg %p232
        $region102: #{tpu_custom_call.1} parent=87 // pred_check_branch
          %626 = sbr.rel (%p624) target = $region104
        $region103: #{tpu_custom_call.1} parent=87 // pred_region
          %627 = dma.done [#allocation12], 256
        $region104: #{tpu_custom_call.1} parent=87 // pred_fallthru
          _
        // Predicated region
        $region105: #{tpu_custom_call.1} parent=87 // pred_check
          %p628 = pneg %p253
        $region106: #{tpu_custom_call.1} parent=87 // pred_check_branch
          %630 = sbr.rel (%p628) target = $region108
        $region107: #{tpu_custom_call.1} parent=87 // pred_region
          %631 = dma.done [#allocation12], 16
        $region108: #{tpu_custom_call.1} parent=87 // pred_fallthru
          _
        %s632 = smul.u32 2, %s43
        %p633 = scmp.lt.s32.totalorder %s42, 1
        %s634 = scalar_select %p633, %s42, 1
        %p635 = scmp.lt.s32.totalorder %s632, 3
        %s636 = scalar_select %p635, %s632, 3
        %s637 = smul.addr %s634, 4
        %s638 = sadd.s32 %s636, %s637
        %s639 = smul.addr %s638, 8
        %s640 = scalar_lea.vmem %s0, %s639
        %p641 = pneg %p73
        %p642 = pneg %p70
        %s643 = sand.u32 %s86, 1
        %s644 = scalar_lea.sflag [#allocation6], %s643
        %s645 = sand.u32 %s86, 1
        %s646 = smul.addr %s645, 32
        %s647 = scalar_lea.vmem [#allocation5], %s646
        %p648 = pneg %p99
        %p649 = pneg %p96
        %s650 = sand.u32 %s38, 1
        %s651 = scalar_lea.sflag [#allocation9], %s650
        %s652 = sand.u32 %s114, 1
        %s653 = smul.addr %s652, 8
        %s654 = scalar_lea.vmem [#allocation8], %s653
        %p655 = pneg %p127
        %p656 = pneg %p124
        %p657 = pneg %p148
        %p658 = pneg %p145
        %p659 = pneg %p169
        %p660 = pneg %p166
        %p661 = pneg %p190
        %p662 = pneg %p187
        %p663 = pneg %p211
        %p664 = pneg %p208
        %p665 = pneg %p232
        %p666 = pneg %p229
        %p667 = pneg %p253
        %p668 = pneg %p250
        %p669 = pneg %p274
        %p670 = pneg %p271
        %p671 = pneg %p295
        %p672 = pneg %p292
        %p673 = pneg %p316
        %p674 = pneg %p313
        %p675 = pneg %p337
        %p676 = pneg %p334
        %p677 = pneg %p358
        %p678 = pneg %p355
        %p679 = pneg %p379
        %p680 = pneg %p376
        %p681 = pneg %p400
        %p682 = pneg %p397
        %p683 = pneg %p421
        %p684 = pneg %p418
        %p685 = pneg %p449
        %p686 = pneg %p446
        %s687 = sand.u32 %s436, 1
        %s688 = scalar_lea.sflag [#allocation7], %s687
        %s689 = sand.u32 %s436, 1
        %s690 = smul.addr %s689, 16
        %s691 = scalar_lea.vmem [#allocation14], %s690
        %s692 = smul.u32 2, %s43
        %p693 = scmp.lt.s32.totalorder %s42, 1
        %s694 = scalar_select %p693, %s42, 1
        %p695 = scmp.lt.s32.totalorder %s692, 3
        %s696 = scalar_select %p695, %s692, 3
        %s697 = smul.addr %s694, 4
        %s698 = sadd.s32 %s696, %s697
        %s699 = smul.addr %s698, 8
        %s700 = scalar_lea.vmem %s0, %s699
        %s701 = smul.u32 2, %s43
        %s702 = smul.u32 2, %s43
        %s703 = smul.u32 2, %s43
        %p705 = scmp.eq.s32.totalorder %s43, 0
        // Predicated region
        $region109: #{tpu_custom_call.1} parent=87 // pred_check
          %p706 = pneg %p705
        $region110: #{tpu_custom_call.1} parent=87 // pred_check_branch
          %708 = sbr.rel (%p706) target = $region112
        $region111: #{tpu_custom_call.1} parent=87 // pred_region
          %v709 = vld [vmem:[%s606] sm:$0xff]
          %v710 = vld [vmem:[%s606 + $0x8] sm:$0xff]
          %v711 = vld [vmem:[%s606 + $0x10] sm:$0xff]
          %v712 = vld [vmem:[%s606 + $0x18] sm:$0xff]
          %v713 = vpack.c.bf16 %v710, %v709
          %v714 = vpack.c.bf16 %v712, %v711
          %v715 = vld [vmem:[#allocation10] sm:$0xf]
          %v716 = vld [vmem:[#allocation10 + $0x4] sm:$0xf]
          %v717 = vld [vmem:[#allocation10 + $0x8] sm:$0xf]
          %v718 = vld [vmem:[#allocation10 + $0xc] sm:$0xf]
          %v719 = vld [vmem:[%s6] sm:$0x1]
          %v721 = vlaneseq
          %v722 = vshrl.u32 %v721, 7
          %v723 = vsub.s32 0, %v722
          %v724 = vrot.slane %v719, %v723
          %v730 = vunpack.c.l.b16 %v715
          %v731 = vunpack.c.l.b16 %v716
          %v732 = vunpack.c.l.b16 %v717
          %v733 = vunpack.c.l.b16 %v718
          %v734 = vpack.c.b16 %v731, %v730
          %v735 = vpack.c.b16 %v733, %v732
          %vm738 = vcmask 261120
          %v740 = vsel %vm738, %v713, 0
          %v743 = vsel %vm738, %v714, 0
          %745 = vmatprep.subr.bf16.mxu0 0
          %746 = vmatpush1.bf16.msra.mxu0 %v734
          %747 = vmatprep.subr.bf16.mxu0 0
          %748 = vmatpush1.bf16.msra.mxu0 %v735
          %749 = vmatprep.subr.bf16.mxu0 0
          %750 = vmatpush1.bf16.msra.mxu0 0
          %751 = vmatprep.subr.bf16.mxu0 0
          %752 = vmatpush1.bf16.msra.mxu0 0
          %753 = vmatprep.subr.bf16.mxu0 0
          %754 = vmatpush1.bf16.msra.mxu0 0
          %755 = vmatprep.subr.bf16.mxu0 0
          %756 = vmatpush1.bf16.msra.mxu0 0
          %757 = vmatprep.subr.bf16.mxu0 0
          %758 = vmatpush1.bf16.msra.mxu0 0
          %759 = vmatprep.subr.bf16.mxu0 0
          %760 = vmatpush1.bf16.msra.mxu0 0
          %761 = vmatprep.subr.bf16.mxu0 0
          %762 = vmatpush1.bf16.msra.mxu0 0
          %763 = vmatprep.subr.bf16.mxu0 0
          %764 = vmatpush1.bf16.msra.mxu0 0
          %765 = vmatprep.subr.bf16.mxu0 0
          %766 = vmatpush1.bf16.msra.mxu0 0
          %767 = vmatprep.subr.bf16.mxu0 0
          %768 = vmatpush1.bf16.msra.mxu0 0
          %769 = vmatprep.subr.bf16.mxu0 0
          %770 = vmatpush1.bf16.msra.mxu0 0
          %771 = vmatprep.subr.bf16.mxu0 0
          %772 = vmatpush1.bf16.msra.mxu0 0
          %773 = vmatprep.subr.bf16.mxu0 0
          %774 = vmatpush1.bf16.msra.mxu0 0
          %775 = vmatprep.subr.bf16.mxu0 0
          %776 = vmatpush1.bf16.msra.mxu0 0
          %777 = vmatprep.mubr.bf16.mxu0 0
          %778 = vmatmul.mubr.bf16.gmra.mrb[0].mxu0 %v740
          %v779 = vpop.f32.mrb[0].mxu0
          %v780 = vadd.f32 %v724, %v779
          %v781 = vpop.f32.mrb[0].mxu0
          %v782 = vpop.f32.mrb[0].mxu0
          %v783 = vadd.f32 %v724, %v782
          %v784 = vpop.f32.mrb[0].mxu0
          %785 = vmatprep.mubr.bf16.mxu0 0
          %786 = vmatmul.mubr.bf16.gmra.mrb[0].mxu0 %v743
          %v787 = vpop.f32.mrb[0].mxu0
          %v788 = vadd.f32 %v724, %v787
          %v789 = vpop.f32.mrb[0].mxu0
          %v790 = vpop.f32.mrb[0].mxu0
          %v791 = vadd.f32 %v724, %v790
          %v792 = vpop.f32.mrb[0].mxu0
          %793 = vdwg.mxu0
          %v794 = vpack.c.bf16 %v783, %v780
          %v795 = vpack.c.bf16 %v791, %v788
          %vm796 = vcmask 64512
          %797 = vst.msk [vmem:[#allocation2] sm:$0xff] %vm796, %v794
          %798 = vst.msk [vmem:[#allocation2 + $0x8] sm:$0xff] %vm796, %v795
          %801 = vrot.lane.b32.xlu0 %v794, 96
          %v802 = vpop.permute.xlu0 %801
          %803 = vrot.lane.b32.xlu0 %v795, 96
          %v804 = vpop.permute.xlu0 %803
          %807 = vst.msk [vmem:[#allocation3] sm:$0xff] %vm796, %v802
          %808 = vst.msk [vmem:[#allocation3 + $0x8] sm:$0xff] %vm796, %v804
          %809 = vrot.lane.b32.xlu0 %v794, 120
          %v810 = vpop.permute.xlu0 %809
          %811 = vrot.lane.b32.xlu0 %v795, 120
          %v812 = vpop.permute.xlu0 %811
          %s815 = scalar_lea.vmem [#allocation2], 16
          %816 = vst.msk [vmem:[%s815] sm:$0xff] %vm796, %v810
          %817 = vst.msk [vmem:[%s815 + $0x8] sm:$0xff] %vm796, %v812
          %818 = vrot.lane.b32.xlu0 %v794, 88
          %v819 = vpop.permute.xlu0 %818
          %820 = vrot.lane.b32.xlu0 %v795, 88
          %v821 = vpop.permute.xlu0 %820
          %s824 = scalar_lea.vmem [#allocation3], 16
          %825 = vst.msk [vmem:[%s824] sm:$0xff] %vm796, %v819
          %826 = vst.msk [vmem:[%s824 + $0x8] sm:$0xff] %vm796, %v821
          %827 = vrot.lane.b32.xlu0 %v794, 112
          %v828 = vpop.permute.xlu0 %827
          %829 = vrot.lane.b32.xlu0 %v795, 112
          %v830 = vpop.permute.xlu0 %829
          %s833 = scalar_lea.vmem [#allocation2], 32
          %834 = vst.msk [vmem:[%s833] sm:$0xff] %vm796, %v828
          %835 = vst.msk [vmem:[%s833 + $0x8] sm:$0xff] %vm796, %v830
          %836 = vrot.lane.b32.xlu0 %v794, 80
          %v837 = vpop.permute.xlu0 %836
          %838 = vrot.lane.b32.xlu0 %v795, 80
          %v839 = vpop.permute.xlu0 %838
          %s842 = scalar_lea.vmem [#allocation3], 32
          %843 = vst.msk [vmem:[%s842] sm:$0xff] %vm796, %v837
          %844 = vst.msk [vmem:[%s842 + $0x8] sm:$0xff] %vm796, %v839
          %845 = vrot.lane.b32.xlu0 %v794, 104
          %v846 = vpop.permute.xlu0 %845
          %847 = vrot.lane.b32.xlu0 %v795, 104
          %v848 = vpop.permute.xlu0 %847
          %s851 = scalar_lea.vmem [#allocation2], 48
          %852 = vst.msk [vmem:[%s851] sm:$0xff] %vm796, %v846
          %853 = vst.msk [vmem:[%s851 + $0x8] sm:$0xff] %vm796, %v848
          %854 = vrot.lane.b32.xlu0 %v794, 72
          %v855 = vpop.permute.xlu0 %854
          %856 = vrot.lane.b32.xlu0 %v795, 72
          %v857 = vpop.permute.xlu0 %856
          %s860 = scalar_lea.vmem [#allocation3], 48
          %861 = vst.msk [vmem:[%s860] sm:$0xff] %vm796, %v855
          %862 = vst.msk [vmem:[%s860 + $0x8] sm:$0xff] %vm796, %v857
        $region112: #{tpu_custom_call.1} parent=87 // pred_fallthru
          _
        %v863 = vld [vmem:[%s700] sm:$0xff]
        %v864 = vld [vmem:[%s700 + $0x8] sm:$0xff]
        %v865 = vpack.c.bf16 %v864, %v863
        %v866 = vld [vmem:[%s3] sm:$0xf]
        %v867 = vld [vmem:[%s3 + $0x4] sm:$0xf]
        %v868 = vld [vmem:[%s3 + $0x8] sm:$0xf]
        %v869 = vld [vmem:[%s3 + $0xc] sm:$0xf]
        %v870 = vld [vmem:[%s4] sm:$0x1]
        %v872 = vlaneseq
        %v873 = vshrl.u32 %v872, 7
        %v874 = vsub.s32 0, %v873
        %v875 = vrot.slane %v870, %v874
        %v881 = vunpack.c.l.b16 %v866
        %v882 = vunpack.c.l.b16 %v867
        %v883 = vunpack.c.l.b16 %v868
        %v884 = vunpack.c.l.b16 %v869
        %v885 = vpack.c.b16 %v882, %v881
        %v886 = vpack.c.b16 %v884, %v883
        %vm889 = vcmask 261120
        %v891 = vsel %vm889, %v865, 0
        %893 = vmatprep.subr.bf16.mxu0 0
        %894 = vmatpush1.bf16.msra.mxu0 %v885
        %895 = vmatprep.subr.bf16.mxu0 0
        %896 = vmatpush1.bf16.msra.mxu0 %v886
        %897 = vmatprep.subr.bf16.mxu0 0
        %898 = vmatpush1.bf16.msra.mxu0 0
        %899 = vmatprep.subr.bf16.mxu0 0
        %900 = vmatpush1.bf16.msra.mxu0 0
        %901 = vmatprep.subr.bf16.mxu0 0
        %902 = vmatpush1.bf16.msra.mxu0 0
        %903 = vmatprep.subr.bf16.mxu0 0
        %904 = vmatpush1.bf16.msra.mxu0 0
        %905 = vmatprep.subr.bf16.mxu0 0
        %906 = vmatpush1.bf16.msra.mxu0 0
        %907 = vmatprep.subr.bf16.mxu0 0
        %908 = vmatpush1.bf16.msra.mxu0 0
        %909 = vmatprep.subr.bf16.mxu0 0
        %910 = vmatpush1.bf16.msra.mxu0 0
        %911 = vmatprep.subr.bf16.mxu0 0
        %912 = vmatpush1.bf16.msra.mxu0 0
        %913 = vmatprep.subr.bf16.mxu0 0
        %914 = vmatpush1.bf16.msra.mxu0 0
        %915 = vmatprep.subr.bf16.mxu0 0
        %916 = vmatpush1.bf16.msra.mxu0 0
        %917 = vmatprep.subr.bf16.mxu0 0
        %918 = vmatpush1.bf16.msra.mxu0 0
        %919 = vmatprep.subr.bf16.mxu0 0
        %920 = vmatpush1.bf16.msra.mxu0 0
        %921 = vmatprep.subr.bf16.mxu0 0
        %922 = vmatpush1.bf16.msra.mxu0 0
        %923 = vmatprep.subr.bf16.mxu0 0
        %924 = vmatpush1.bf16.msra.mxu0 0
        %925 = vmatprep.mubr.bf16.mxu0 0
        %926 = vmatmul.mubr.bf16.gmra.mrb[0].mxu0 %v891
        %v927 = vpop.f32.mrb[0].mxu0
        %v928 = vadd.f32 %v875, %v927
        %v929 = vpop.f32.mrb[0].mxu0
        %v930 = vpop.f32.mrb[0].mxu0
        %v931 = vadd.f32 %v875, %v930
        %v932 = vpop.f32.mrb[0].mxu0
        %933 = vdwg.mxu0
        %v934 = vmul.f32 %v928, 0.35355338
        %v935 = vmul.f32 %v931, 0.35355338
        %v936 = vpack.c.bf16 %v935, %v934
        %vm937 = vcmask 64512
        %938 = vst.msk [vmem:[#allocation4] sm:$0xff] %vm937, %v936
        %940 = vrot.lane.b32.xlu0 %v936, 120
        %v941 = vpop.permute.xlu0 %940
        %s943 = scalar_lea.vmem [#allocation4], 8
        %944 = vst.msk [vmem:[%s943] sm:$0xff] %vm937, %v941
        %945 = vrot.lane.b32.xlu0 %v936, 112
        %v946 = vpop.permute.xlu0 %945
        %s948 = scalar_lea.vmem [#allocation4], 16
        %949 = vst.msk [vmem:[%s948] sm:$0xff] %vm937, %v946
        %950 = vrot.lane.b32.xlu0 %v936, 104
        %v951 = vpop.permute.xlu0 %950
        %s953 = scalar_lea.vmem [#allocation4], 24
        %954 = vst.msk [vmem:[%s953] sm:$0xff] %vm937, %v951
        %v955 = vld [vmem:[#allocation4] sm:$0xff]
        %v956 = vld [vmem:[#allocation4 + $0x8] sm:$0xff]
        %v957 = vld [vmem:[#allocation4 + $0x10] sm:$0xff]
        %v958 = vld [vmem:[#allocation4 + $0x18] sm:$0xff]
        %v959 = vld [vmem:[#allocation2] sm:$0xff]
        %v960 = vld [vmem:[#allocation2 + $0x8] sm:$0xff]
        %v961 = vld [vmem:[#allocation2 + $0x10] sm:$0xff]
        %v962 = vld [vmem:[#allocation2 + $0x18] sm:$0xff]
        %v963 = vld [vmem:[#allocation2 + $0x20] sm:$0xff]
        %v964 = vld [vmem:[#allocation2 + $0x28] sm:$0xff]
        %v965 = vld [vmem:[#allocation2 + $0x30] sm:$0xff]
        %v966 = vld [vmem:[#allocation2 + $0x38] sm:$0xff]
        %v967 = vld [vmem:[#allocation3] sm:$0xff]
        %v968 = vld [vmem:[#allocation3 + $0x8] sm:$0xff]
        %v969 = vld [vmem:[#allocation3 + $0x10] sm:$0xff]
        %v970 = vld [vmem:[#allocation3 + $0x18] sm:$0xff]
        %v971 = vld [vmem:[#allocation3 + $0x20] sm:$0xff]
        %v972 = vld [vmem:[#allocation3 + $0x28] sm:$0xff]
        %v973 = vld [vmem:[#allocation3 + $0x30] sm:$0xff]
        %v974 = vld [vmem:[#allocation3 + $0x38] sm:$0xff]
        %v976 = vsel %vm937, %v955, 0
        %v979 = vsel %vm937, %v959, 0
        %v982 = vsel %vm937, %v960, 0
        %984 = vmatprep.subr.bf16.mxu0 0
        %985 = vmatpush1.bf16.xpose.msra.mxu0 %v979
        %986 = vmatprep.subr.bf16.mxu0 0
        %987 = vmatpush1.bf16.xpose.msra.mxu0 %v982
        %988 = vmatprep.subr.bf16.mxu0 0
        %989 = vmatpush1.bf16.xpose.msra.mxu0 0
        %990 = vmatprep.subr.bf16.mxu0 0
        %991 = vmatpush1.bf16.xpose.msra.mxu0 0
        %992 = vmatprep.subr.bf16.mxu0 0
        %993 = vmatpush1.bf16.xpose.msra.mxu0 0
        %994 = vmatprep.subr.bf16.mxu0 0
        %995 = vmatpush1.bf16.xpose.msra.mxu0 0
        %996 = vmatprep.subr.bf16.mxu0 0
        %997 = vmatpush1.bf16.xpose.msra.mxu0 0
        %998 = vmatprep.subr.bf16.mxu0 0
        %999 = vmatpush1.bf16.xpose.msra.mxu0 0
        %1000 = vmatprep.subr.bf16.mxu0 0
        %1001 = vmatpush1.bf16.xpose.msra.mxu0 0
        %1002 = vmatprep.subr.bf16.mxu0 0
        %1003 = vmatpush1.bf16.xpose.msra.mxu0 0
        %1004 = vmatprep.subr.bf16.mxu0 0
        %1005 = vmatpush1.bf16.xpose.msra.mxu0 0
        %1006 = vmatprep.subr.bf16.mxu0 0
        %1007 = vmatpush1.bf16.xpose.msra.mxu0 0
        %1008 = vmatprep.subr.bf16.mxu0 0
        %1009 = vmatpush1.bf16.xpose.msra.mxu0 0
        %1010 = vmatprep.subr.bf16.mxu0 0
        %1011 = vmatpush1.bf16.xpose.msra.mxu0 0
        %1012 = vmatprep.subr.bf16.mxu0 0
        %1013 = vmatpush1.bf16.xpose.msra.mxu0 0
        %1014 = vmatprep.subr.bf16.mxu0 0
        %1015 = vmatpush1.bf16.xpose.msra.mxu0 0
        %1016 = vmatprep.mubr.bf16.mxu0 0
        %1017 = vmatmul.mubr.bf16.gmra.mrb[0].mxu0 %v976
        %v1018 = vpop.f32.mrb[0].mxu0
        %v1019 = vadd.f32 0.0, %v1018
        %v1020 = vpop.f32.mrb[0].mxu0
        %v1021 = vpop.f32.mrb[0].mxu0
        %v1022 = vadd.f32 0.0, %v1021
        %v1023 = vpop.f32.mrb[0].mxu0
        %1024 = vdwg.mxu0
        %v1026 = vsel %vm937, %v956, 0
        %v1029 = vsel %vm937, %v961, 0
        %v1032 = vsel %vm937, %v962, 0
        %1034 = vmatprep.subr.bf16.mxu0 0
        %1035 = vmatpush1.bf16.xpose.msra.mxu0 %v1029
        %1036 = vmatprep.subr.bf16.mxu0 0
        %1037 = vmatpush1.bf16.xpose.msra.mxu0 %v1032
        %1038 = vmatprep.subr.bf16.mxu0 0
        %1039 = vmatpush1.bf16.xpose.msra.mxu0 0
        %1040 = vmatprep.subr.bf16.mxu0 0
        %1041 = vmatpush1.bf16.xpose.msra.mxu0 0
        %1042 = vmatprep.subr.bf16.mxu0 0
        %1043 = vmatpush1.bf16.xpose.msra.mxu0 0
        %1044 = vmatprep.subr.bf16.mxu0 0
        %1045 = vmatpush1.bf16.xpose.msra.mxu0 0
        %1046 = vmatprep.subr.bf16.mxu0 0
        %1047 = vmatpush1.bf16.xpose.msra.mxu0 0
        %1048 = vmatprep.subr.bf16.mxu0 0
        %1049 = vmatpush1.bf16.xpose.msra.mxu0 0
        %1050 = vmatprep.subr.bf16.mxu0 0
        %1051 = vmatpush1.bf16.xpose.msra.mxu0 0
        %1052 = vmatprep.subr.bf16.mxu0 0
        %1053 = vmatpush1.bf16.xpose.msra.mxu0 0
        %1054 = vmatprep.subr.bf16.mxu0 0
        %1055 = vmatpush1.bf16.xpose.msra.mxu0 0
        %1056 = vmatprep.subr.bf16.mxu0 0
        %1057 = vmatpush1.bf16.xpose.msra.mxu0 0
        %1058 = vmatprep.subr.bf16.mxu0 0
        %1059 = vmatpush1.bf16.xpose.msra.mxu0 0
        %1060 = vmatprep.subr.bf16.mxu0 0
        %1061 = vmatpush1.bf16.xpose.msra.mxu0 0
        %1062 = vmatprep.subr.bf16.mxu0 0
        %1063 = vmatpush1.bf16.xpose.msra.mxu0 0
        %1064 = vmatprep.subr.bf16.mxu0 0
        %1065 = vmatpush1.bf16.xpose.msra.mxu0 0
        %1066 = vmatprep.mubr.bf16.mxu0 0
        %1067 = vmatmul.mubr.bf16.gmra.mrb[0].mxu0 %v1026
        %v1068 = vpop.f32.mrb[0].mxu0
        %v1069 = vadd.f32 0.0, %v1068
        %v1070 = vpop.f32.mrb[0].mxu0
        %v1071 = vpop.f32.mrb[0].mxu0
        %v1072 = vadd.f32 0.0, %v1071
        %v1073 = vpop.f32.mrb[0].mxu0
        %1074 = vdwg.mxu0
        %v1076 = vsel %vm937, %v957, 0
        %v1079 = vsel %vm937, %v963, 0
        %v1082 = vsel %vm937, %v964, 0
        %1084 = vmatprep.subr.bf16.mxu0 0
        %1085 = vmatpush1.bf16.xpose.msra.mxu0 %v1079
        %1086 = vmatprep.subr.bf16.mxu0 0
        %1087 = vmatpush1.bf16.xpose.msra.mxu0 %v1082
        %1088 = vmatprep.subr.bf16.mxu0 0
        %1089 = vmatpush1.bf16.xpose.msra.mxu0 0
        %1090 = vmatprep.subr.bf16.mxu0 0
        %1091 = vmatpush1.bf16.xpose.msra.mxu0 0
        %1092 = vmatprep.subr.bf16.mxu0 0
        %1093 = vmatpush1.bf16.xpose.msra.mxu0 0
        %1094 = vmatprep.subr.bf16.mxu0 0
        %1095 = vmatpush1.bf16.xpose.msra.mxu0 0
        %1096 = vmatprep.subr.bf16.mxu0 0
        %1097 = vmatpush1.bf16.xpose.msra.mxu0 0
        %1098 = vmatprep.subr.bf16.mxu0 0
        %1099 = vmatpush1.bf16.xpose.msra.mxu0 0
        %1100 = vmatprep.subr.bf16.mxu0 0
        %1101 = vmatpush1.bf16.xpose.msra.mxu0 0
        %1102 = vmatprep.subr.bf16.mxu0 0
        %1103 = vmatpush1.bf16.xpose.msra.mxu0 0
        %1104 = vmatprep.subr.bf16.mxu0 0
        %1105 = vmatpush1.bf16.xpose.msra.mxu0 0
        %1106 = vmatprep.subr.bf16.mxu0 0
        %1107 = vmatpush1.bf16.xpose.msra.mxu0 0
        %1108 = vmatprep.subr.bf16.mxu0 0
        %1109 = vmatpush1.bf16.xpose.msra.mxu0 0
        %1110 = vmatprep.subr.bf16.mxu0 0
        %1111 = vmatpush1.bf16.xpose.msra.mxu0 0
        %1112 = vmatprep.subr.bf16.mxu0 0
        %1113 = vmatpush1.bf16.xpose.msra.mxu0 0
        %1114 = vmatprep.subr.bf16.mxu0 0
        %1115 = vmatpush1.bf16.xpose.msra.mxu0 0
        %1116 = vmatprep.mubr.bf16.mxu0 0
        %1117 = vmatmul.mubr.bf16.gmra.mrb[0].mxu0 %v1076
        %v1118 = vpop.f32.mrb[0].mxu0
        %v1119 = vadd.f32 0.0, %v1118
        %v1120 = vpop.f32.mrb[0].mxu0
        %v1121 = vpop.f32.mrb[0].mxu0
        %v1122 = vadd.f32 0.0, %v1121
        %v1123 = vpop.f32.mrb[0].mxu0
        %1124 = vdwg.mxu0
        %v1126 = vsel %vm937, %v958, 0
        %v1129 = vsel %vm937, %v965, 0
        %v1132 = vsel %vm937, %v966, 0
        %1134 = vmatprep.subr.bf16.mxu0 0
        %1135 = vmatpush1.bf16.xpose.msra.mxu0 %v1129
        %1136 = vmatprep.subr.bf16.mxu0 0
        %1137 = vmatpush1.bf16.xpose.msra.mxu0 %v1132
        %1138 = vmatprep.subr.bf16.mxu0 0
        %1139 = vmatpush1.bf16.xpose.msra.mxu0 0
        %1140 = vmatprep.subr.bf16.mxu0 0
        %1141 = vmatpush1.bf16.xpose.msra.mxu0 0
        %1142 = vmatprep.subr.bf16.mxu0 0
        %1143 = vmatpush1.bf16.xpose.msra.mxu0 0
        %1144 = vmatprep.subr.bf16.mxu0 0
        %1145 = vmatpush1.bf16.xpose.msra.mxu0 0
        %1146 = vmatprep.subr.bf16.mxu0 0
        %1147 = vmatpush1.bf16.xpose.msra.mxu0 0
        %1148 = vmatprep.subr.bf16.mxu0 0
        %1149 = vmatpush1.bf16.xpose.msra.mxu0 0
        %1150 = vmatprep.subr.bf16.mxu0 0
        %1151 = vmatpush1.bf16.xpose.msra.mxu0 0
        %1152 = vmatprep.subr.bf16.mxu0 0
        %1153 = vmatpush1.bf16.xpose.msra.mxu0 0
        %1154 = vmatprep.subr.bf16.mxu0 0
        %1155 = vmatpush1.bf16.xpose.msra.mxu0 0
        %1156 = vmatprep.subr.bf16.mxu0 0
        %1157 = vmatpush1.bf16.xpose.msra.mxu0 0
        %1158 = vmatprep.subr.bf16.mxu0 0
        %1159 = vmatpush1.bf16.xpose.msra.mxu0 0
        %1160 = vmatprep.subr.bf16.mxu0 0
        %1161 = vmatpush1.bf16.xpose.msra.mxu0 0
        %1162 = vmatprep.subr.bf16.mxu0 0
        %1163 = vmatpush1.bf16.xpose.msra.mxu0 0
        %1164 = vmatprep.subr.bf16.mxu0 0
        %1165 = vmatpush1.bf16.xpose.msra.mxu0 0
        %1166 = vmatprep.mubr.bf16.mxu0 0
        %1167 = vmatmul.mubr.bf16.gmra.mrb[0].mxu0 %v1126
        %v1168 = vpop.f32.mrb[0].mxu0
        %v1169 = vadd.f32 0.0, %v1168
        %v1170 = vpop.f32.mrb[0].mxu0
        %v1171 = vpop.f32.mrb[0].mxu0
        %v1172 = vadd.f32 0.0, %v1171
        %v1173 = vpop.f32.mrb[0].mxu0
        %1174 = vdwg.mxu0
        %v1175 = vld [vmem:[%s615] sm:$0xf]
        %v1176 = vld [vmem:[%s615 + $0x4] sm:$0xf]
        %v1177 = vunpack.c.l.bf16 %v1175
        %v1178 = vunpack.c.l.bf16 %v1176
        %vm1179 = vcmp.eq.f32.partialorder %v1177, 0.0
        %vm1180 = vcmp.eq.f32.partialorder %v1178, 0.0
        %v1181 = vsel %vm1179, 1, 0
        %v1182 = vsel %vm1180, 1, 0
        %vm1183 = vcmp.eq.s32.totalorder %v1181, 1
        %vm1184 = vcmp.eq.s32.totalorder %v1182, 1
        %v1185 = vsel %vm1183, -1e+09, %v1019
        %v1186 = vsel %vm1184, -1e+09, %v1022
        %v1187 = vsel %vm1183, -1e+09, %v1069
        %v1188 = vsel %vm1184, -1e+09, %v1072
        %v1189 = vsel %vm1183, -1e+09, %v1119
        %v1190 = vsel %vm1184, -1e+09, %v1122
        %v1191 = vsel %vm1183, -1e+09, %v1169
        %v1192 = vsel %vm1184, -1e+09, %v1172
        %v1193 = vsel %vm889, %v1185, -inf
        %1194 = vmax.xlane.f32.xlu0 %v1193
        %v1195 = vpop.xlane.xlu0 %1194
        %v1196 = vsel %vm889, %v1186, -inf
        %1197 = vmax.xlane.f32.xlu0 %v1196
        %v1198 = vpop.xlane.xlu0 %1197
        %v1199 = vsel %vm889, %v1187, -inf
        %1200 = vmax.xlane.f32.xlu0 %v1199
        %v1201 = vpop.xlane.xlu0 %1200
        %v1202 = vsel %vm889, %v1188, -inf
        %1203 = vmax.xlane.f32.xlu0 %v1202
        %v1204 = vpop.xlane.xlu0 %1203
        %v1205 = vsel %vm889, %v1189, -inf
        %1206 = vmax.xlane.f32.xlu0 %v1205
        %v1207 = vpop.xlane.xlu0 %1206
        %v1208 = vsel %vm889, %v1190, -inf
        %1209 = vmax.xlane.f32.xlu0 %v1208
        %v1210 = vpop.xlane.xlu0 %1209
        %v1211 = vsel %vm889, %v1191, -inf
        %1212 = vmax.xlane.f32.xlu0 %v1211
        %v1213 = vpop.xlane.xlu0 %1212
        %v1214 = vsel %vm889, %v1192, -inf
        %1215 = vmax.xlane.f32.xlu0 %v1214
        %v1216 = vpop.xlane.xlu0 %1215
        %v1217 = vsub.f32 %v1185, %v1195
        %v1218 = vsub.f32 %v1186, %v1198
        %v1219 = vsub.f32 %v1187, %v1201
        %v1220 = vsub.f32 %v1188, %v1204
        %v1221 = vsub.f32 %v1189, %v1207
        %v1222 = vsub.f32 %v1190, %v1210
        %v1223 = vsub.f32 %v1191, %v1213
        %v1224 = vsub.f32 %v1192, %v1216
        %v1225 = vmul.f32 %v1217, 1.442695
        %v1226 = vpow.pop %v1225
        %v1227 = vmul.f32 %v1218, 1.442695
        %v1228 = vpow.pop %v1227
        %v1229 = vmul.f32 %v1219, 1.442695
        %v1230 = vpow.pop %v1229
        %v1231 = vmul.f32 %v1220, 1.442695
        %v1232 = vpow.pop %v1231
        %v1233 = vmul.f32 %v1221, 1.442695
        %v1234 = vpow.pop %v1233
        %v1235 = vmul.f32 %v1222, 1.442695
        %v1236 = vpow.pop %v1235
        %v1237 = vmul.f32 %v1223, 1.442695
        %v1238 = vpow.pop %v1237
        %v1239 = vmul.f32 %v1224, 1.442695
        %v1240 = vpow.pop %v1239
        %v1241 = vsel %vm889, %v1226, 0.0
        %1242 = vadd.xlane.f32.xlu0 %v1241
        %v1243 = vpop.xlane.xlu0 %1242
        %v1244 = vsel %vm889, %v1228, 0.0
        %1245 = vadd.xlane.f32.xlu0 %v1244
        %v1246 = vpop.xlane.xlu0 %1245
        %v1247 = vsel %vm889, %v1230, 0.0
        %1248 = vadd.xlane.f32.xlu0 %v1247
        %v1249 = vpop.xlane.xlu0 %1248
        %v1250 = vsel %vm889, %v1232, 0.0
        %1251 = vadd.xlane.f32.xlu0 %v1250
        %v1252 = vpop.xlane.xlu0 %1251
        %v1253 = vsel %vm889, %v1234, 0.0
        %1254 = vadd.xlane.f32.xlu0 %v1253
        %v1255 = vpop.xlane.xlu0 %1254
        %v1256 = vsel %vm889, %v1236, 0.0
        %1257 = vadd.xlane.f32.xlu0 %v1256
        %v1258 = vpop.xlane.xlu0 %1257
        %v1259 = vsel %vm889, %v1238, 0.0
        %1260 = vadd.xlane.f32.xlu0 %v1259
        %v1261 = vpop.xlane.xlu0 %1260
        %v1262 = vsel %vm889, %v1240, 0.0
        %1263 = vadd.xlane.f32.xlu0 %v1262
        %v1264 = vpop.xlane.xlu0 %1263
        %v1265 = vrcp.pop %v1243
        %v1266 = vrcp.pop %v1246
        %v1267 = vrcp.pop %v1249
        %v1268 = vrcp.pop %v1252
        %v1269 = vrcp.pop %v1255
        %v1270 = vrcp.pop %v1258
        %v1271 = vrcp.pop %v1261
        %v1272 = vrcp.pop %v1264
        %v1273 = vmul.f32 %v1226, %v1265
        %v1274 = vmul.f32 %v1228, %v1266
        %v1275 = vmul.f32 %v1230, %v1267
        %v1276 = vmul.f32 %v1232, %v1268
        %v1277 = vmul.f32 %v1234, %v1269
        %v1278 = vmul.f32 %v1236, %v1270
        %v1279 = vmul.f32 %v1238, %v1271
        %v1280 = vmul.f32 %v1240, %v1272
        %v1281 = vpack.c.bf16 %v1274, %v1273
        %v1282 = vpack.c.bf16 %v1276, %v1275
        %v1283 = vpack.c.bf16 %v1278, %v1277
        %v1284 = vpack.c.bf16 %v1280, %v1279
        %v1286 = vsel %vm889, %v1281, 0
        %1288 = vmatprep.subr.bf16.mxu0 0
        %1289 = vmatpush1.bf16.msra.mxu0 %v967
        %1290 = vmatprep.subr.bf16.mxu0 0
        %1291 = vmatpush1.bf16.msra.mxu0 %v968
        %1292 = vmatprep.subr.bf16.mxu0 0
        %1293 = vmatpush1.bf16.msra.mxu0 0
        %1294 = vmatprep.subr.bf16.mxu0 0
        %1295 = vmatpush1.bf16.msra.mxu0 0
        %1296 = vmatprep.subr.bf16.mxu0 0
        %1297 = vmatpush1.bf16.msra.mxu0 0
        %1298 = vmatprep.subr.bf16.mxu0 0
        %1299 = vmatpush1.bf16.msra.mxu0 0
        %1300 = vmatprep.subr.bf16.mxu0 0
        %1301 = vmatpush1.bf16.msra.mxu0 0
        %1302 = vmatprep.subr.bf16.mxu0 0
        %1303 = vmatpush1.bf16.msra.mxu0 0
        %1304 = vmatprep.subr.bf16.mxu0 0
        %1305 = vmatpush1.bf16.msra.mxu0 0
        %1306 = vmatprep.subr.bf16.mxu0 0
        %1307 = vmatpush1.bf16.msra.mxu0 0
        %1308 = vmatprep.subr.bf16.mxu0 0
        %1309 = vmatpush1.bf16.msra.mxu0 0
        %1310 = vmatprep.subr.bf16.mxu0 0
        %1311 = vmatpush1.bf16.msra.mxu0 0
        %1312 = vmatprep.subr.bf16.mxu0 0
        %1313 = vmatpush1.bf16.msra.mxu0 0
        %1314 = vmatprep.subr.bf16.mxu0 0
        %1315 = vmatpush1.bf16.msra.mxu0 0
        %1316 = vmatprep.subr.bf16.mxu0 0
        %1317 = vmatpush1.bf16.msra.mxu0 0
        %1318 = vmatprep.subr.bf16.mxu0 0
        %1319 = vmatpush1.bf16.msra.mxu0 0
        %1320 = vmatprep.mubr.bf16.mxu0 0
        %1321 = vmatmul.mubr.bf16.gmra.mrb[0].mxu0 %v1286
        %v1322 = vpop.f32.mrb[0].mxu0
        %v1323 = vadd.f32 0.0, %v1322
        %v1324 = vpop.f32.mrb[0].mxu0
        %v1325 = vpop.f32.mrb[0].mxu0
        %v1326 = vadd.f32 0.0, %v1325
        %v1327 = vpop.f32.mrb[0].mxu0
        %1328 = vdwg.mxu0
        %v1330 = vsel %vm889, %v1282, 0
        %1332 = vmatprep.subr.bf16.mxu0 0
        %1333 = vmatpush1.bf16.msra.mxu0 %v969
        %1334 = vmatprep.subr.bf16.mxu0 0
        %1335 = vmatpush1.bf16.msra.mxu0 %v970
        %1336 = vmatprep.subr.bf16.mxu0 0
        %1337 = vmatpush1.bf16.msra.mxu0 0
        %1338 = vmatprep.subr.bf16.mxu0 0
        %1339 = vmatpush1.bf16.msra.mxu0 0
        %1340 = vmatprep.subr.bf16.mxu0 0
        %1341 = vmatpush1.bf16.msra.mxu0 0
        %1342 = vmatprep.subr.bf16.mxu0 0
        %1343 = vmatpush1.bf16.msra.mxu0 0
        %1344 = vmatprep.subr.bf16.mxu0 0
        %1345 = vmatpush1.bf16.msra.mxu0 0
        %1346 = vmatprep.subr.bf16.mxu0 0
        %1347 = vmatpush1.bf16.msra.mxu0 0
        %1348 = vmatprep.subr.bf16.mxu0 0
        %1349 = vmatpush1.bf16.msra.mxu0 0
        %1350 = vmatprep.subr.bf16.mxu0 0
        %1351 = vmatpush1.bf16.msra.mxu0 0
        %1352 = vmatprep.subr.bf16.mxu0 0
        %1353 = vmatpush1.bf16.msra.mxu0 0
        %1354 = vmatprep.subr.bf16.mxu0 0
        %1355 = vmatpush1.bf16.msra.mxu0 0
        %1356 = vmatprep.subr.bf16.mxu0 0
        %1357 = vmatpush1.bf16.msra.mxu0 0
        %1358 = vmatprep.subr.bf16.mxu0 0
        %1359 = vmatpush1.bf16.msra.mxu0 0
        %1360 = vmatprep.subr.bf16.mxu0 0
        %1361 = vmatpush1.bf16.msra.mxu0 0
        %1362 = vmatprep.subr.bf16.mxu0 0
        %1363 = vmatpush1.bf16.msra.mxu0 0
        %1364 = vmatprep.mubr.bf16.mxu0 0
        %1365 = vmatmul.mubr.bf16.gmra.mrb[0].mxu0 %v1330
        %v1366 = vpop.f32.mrb[0].mxu0
        %v1367 = vadd.f32 0.0, %v1366
        %v1368 = vpop.f32.mrb[0].mxu0
        %v1369 = vpop.f32.mrb[0].mxu0
        %v1370 = vadd.f32 0.0, %v1369
        %v1371 = vpop.f32.mrb[0].mxu0
        %1372 = vdwg.mxu0
        %v1374 = vsel %vm889, %v1283, 0
        %1376 = vmatprep.subr.bf16.mxu0 0
        %1377 = vmatpush1.bf16.msra.mxu0 %v971
        %1378 = vmatprep.subr.bf16.mxu0 0
        %1379 = vmatpush1.bf16.msra.mxu0 %v972
        %1380 = vmatprep.subr.bf16.mxu0 0
        %1381 = vmatpush1.bf16.msra.mxu0 0
        %1382 = vmatprep.subr.bf16.mxu0 0
        %1383 = vmatpush1.bf16.msra.mxu0 0
        %1384 = vmatprep.subr.bf16.mxu0 0
        %1385 = vmatpush1.bf16.msra.mxu0 0
        %1386 = vmatprep.subr.bf16.mxu0 0
        %1387 = vmatpush1.bf16.msra.mxu0 0
        %1388 = vmatprep.subr.bf16.mxu0 0
        %1389 = vmatpush1.bf16.msra.mxu0 0
        %1390 = vmatprep.subr.bf16.mxu0 0
        %1391 = vmatpush1.bf16.msra.mxu0 0
        %1392 = vmatprep.subr.bf16.mxu0 0
        %1393 = vmatpush1.bf16.msra.mxu0 0
        %1394 = vmatprep.subr.bf16.mxu0 0
        %1395 = vmatpush1.bf16.msra.mxu0 0
        %1396 = vmatprep.subr.bf16.mxu0 0
        %1397 = vmatpush1.bf16.msra.mxu0 0
        %1398 = vmatprep.subr.bf16.mxu0 0
        %1399 = vmatpush1.bf16.msra.mxu0 0
        %1400 = vmatprep.subr.bf16.mxu0 0
        %1401 = vmatpush1.bf16.msra.mxu0 0
        %1402 = vmatprep.subr.bf16.mxu0 0
        %1403 = vmatpush1.bf16.msra.mxu0 0
        %1404 = vmatprep.subr.bf16.mxu0 0
        %1405 = vmatpush1.bf16.msra.mxu0 0
        %1406 = vmatprep.subr.bf16.mxu0 0
        %1407 = vmatpush1.bf16.msra.mxu0 0
        %1408 = vmatprep.mubr.bf16.mxu0 0
        %1409 = vmatmul.mubr.bf16.gmra.mrb[0].mxu0 %v1374
        %v1410 = vpop.f32.mrb[0].mxu0
        %v1411 = vadd.f32 0.0, %v1410
        %v1412 = vpop.f32.mrb[0].mxu0
        %v1413 = vpop.f32.mrb[0].mxu0
        %v1414 = vadd.f32 0.0, %v1413
        %v1415 = vpop.f32.mrb[0].mxu0
        %1416 = vdwg.mxu0
        %v1418 = vsel %vm889, %v1284, 0
        %1420 = vmatprep.subr.bf16.mxu0 0
        %1421 = vmatpush1.bf16.msra.mxu0 %v973
        %1422 = vmatprep.subr.bf16.mxu0 0
        %1423 = vmatpush1.bf16.msra.mxu0 %v974
        %1424 = vmatprep.subr.bf16.mxu0 0
        %1425 = vmatpush1.bf16.msra.mxu0 0
        %1426 = vmatprep.subr.bf16.mxu0 0
        %1427 = vmatpush1.bf16.msra.mxu0 0
        %1428 = vmatprep.subr.bf16.mxu0 0
        %1429 = vmatpush1.bf16.msra.mxu0 0
        %1430 = vmatprep.subr.bf16.mxu0 0
        %1431 = vmatpush1.bf16.msra.mxu0 0
        %1432 = vmatprep.subr.bf16.mxu0 0
        %1433 = vmatpush1.bf16.msra.mxu0 0
        %1434 = vmatprep.subr.bf16.mxu0 0
        %1435 = vmatpush1.bf16.msra.mxu0 0
        %1436 = vmatprep.subr.bf16.mxu0 0
        %1437 = vmatpush1.bf16.msra.mxu0 0
        %1438 = vmatprep.subr.bf16.mxu0 0
        %1439 = vmatpush1.bf16.msra.mxu0 0
        %1440 = vmatprep.subr.bf16.mxu0 0
        %1441 = vmatpush1.bf16.msra.mxu0 0
        %1442 = vmatprep.subr.bf16.mxu0 0
        %1443 = vmatpush1.bf16.msra.mxu0 0
        %1444 = vmatprep.subr.bf16.mxu0 0
        %1445 = vmatpush1.bf16.msra.mxu0 0
        %1446 = vmatprep.subr.bf16.mxu0 0
        %1447 = vmatpush1.bf16.msra.mxu0 0
        %1448 = vmatprep.subr.bf16.mxu0 0
        %1449 = vmatpush1.bf16.msra.mxu0 0
        %1450 = vmatprep.subr.bf16.mxu0 0
        %1451 = vmatpush1.bf16.msra.mxu0 0
        %1452 = vmatprep.mubr.bf16.mxu0 0
        %1453 = vmatmul.mubr.bf16.gmra.mrb[0].mxu0 %v1418
        %v1454 = vpop.f32.mrb[0].mxu0
        %v1455 = vadd.f32 0.0, %v1454
        %v1456 = vpop.f32.mrb[0].mxu0
        %v1457 = vpop.f32.mrb[0].mxu0
        %v1458 = vadd.f32 0.0, %v1457
        %v1459 = vpop.f32.mrb[0].mxu0
        %1460 = vdwg.mxu0
        %v1461 = vpack.c.bf16 %v1326, %v1323
        %v1462 = vpack.c.bf16 %v1370, %v1367
        %v1463 = vpack.c.bf16 %v1414, %v1411
        %v1464 = vpack.c.bf16 %v1458, %v1455
        %v1465 = vld [vmem:[#allocation11] sm:$0xf]
        %v1466 = vld [vmem:[#allocation11 + $0x4] sm:$0xf]
        %v1467 = vld [vmem:[#allocation11 + $0x8] sm:$0xf]
        %v1468 = vld [vmem:[#allocation11 + $0xc] sm:$0xf]
        %v1470 = vsel %vm937, %v1461, 0
        %vm1472 = vcmask 1043456
        %v1474 = vsel %vm1472, %v1465, 0
        %1476 = vmatprep.subr.bf16.mxu0 0
        %1477 = vmatpush1.bf16.msra.mxu0 %v1474
        %1478 = vmatprep.subr.bf16.mxu0 0
        %1479 = vmatpush1.bf16.msra.mxu0 0
        %1480 = vmatprep.subr.bf16.mxu0 0
        %1481 = vmatpush1.bf16.msra.mxu0 0
        %1482 = vmatprep.subr.bf16.mxu0 0
        %1483 = vmatpush1.bf16.msra.mxu0 0
        %1484 = vmatprep.subr.bf16.mxu0 0
        %1485 = vmatpush1.bf16.msra.mxu0 0
        %1486 = vmatprep.subr.bf16.mxu0 0
        %1487 = vmatpush1.bf16.msra.mxu0 0
        %1488 = vmatprep.subr.bf16.mxu0 0
        %1489 = vmatpush1.bf16.msra.mxu0 0
        %1490 = vmatprep.subr.bf16.mxu0 0
        %1491 = vmatpush1.bf16.msra.mxu0 0
        %1492 = vmatprep.subr.bf16.mxu0 0
        %1493 = vmatpush1.bf16.msra.mxu0 0
        %1494 = vmatprep.subr.bf16.mxu0 0
        %1495 = vmatpush1.bf16.msra.mxu0 0
        %1496 = vmatprep.subr.bf16.mxu0 0
        %1497 = vmatpush1.bf16.msra.mxu0 0
        %1498 = vmatprep.subr.bf16.mxu0 0
        %1499 = vmatpush1.bf16.msra.mxu0 0
        %1500 = vmatprep.subr.bf16.mxu0 0
        %1501 = vmatpush1.bf16.msra.mxu0 0
        %1502 = vmatprep.subr.bf16.mxu0 0
        %1503 = vmatpush1.bf16.msra.mxu0 0
        %1504 = vmatprep.subr.bf16.mxu0 0
        %1505 = vmatpush1.bf16.msra.mxu0 0
        %1506 = vmatprep.subr.bf16.mxu0 0
        %1507 = vmatpush1.bf16.msra.mxu0 0
        %1508 = vmatprep.mubr.bf16.mxu0 0
        %1509 = vmatmul.mubr.bf16.gmra.mrb[0].mxu0 %v1470
        %v1510 = vpop.f32.mrb[0].mxu0
        %v1511 = vadd.f32 0.0, %v1510
        %v1512 = vpop.f32.mrb[0].mxu0
        %v1513 = vpop.f32.mrb[0].mxu0
        %v1514 = vadd.f32 0.0, %v1513
        %v1515 = vpop.f32.mrb[0].mxu0
        %1516 = vdwg.mxu0
        %v1518 = vsel %vm937, %v1462, 0
        %v1521 = vsel %vm1472, %v1466, 0
        %1523 = vmatprep.subr.bf16.mxu0 0
        %1524 = vmatpush1.bf16.msra.mxu0 %v1521
        %1525 = vmatprep.subr.bf16.mxu0 0
        %1526 = vmatpush1.bf16.msra.mxu0 0
        %1527 = vmatprep.subr.bf16.mxu0 0
        %1528 = vmatpush1.bf16.msra.mxu0 0
        %1529 = vmatprep.subr.bf16.mxu0 0
        %1530 = vmatpush1.bf16.msra.mxu0 0
        %1531 = vmatprep.subr.bf16.mxu0 0
        %1532 = vmatpush1.bf16.msra.mxu0 0
        %1533 = vmatprep.subr.bf16.mxu0 0
        %1534 = vmatpush1.bf16.msra.mxu0 0
        %1535 = vmatprep.subr.bf16.mxu0 0
        %1536 = vmatpush1.bf16.msra.mxu0 0
        %1537 = vmatprep.subr.bf16.mxu0 0
        %1538 = vmatpush1.bf16.msra.mxu0 0
        %1539 = vmatprep.subr.bf16.mxu0 0
        %1540 = vmatpush1.bf16.msra.mxu0 0
        %1541 = vmatprep.subr.bf16.mxu0 0
        %1542 = vmatpush1.bf16.msra.mxu0 0
        %1543 = vmatprep.subr.bf16.mxu0 0
        %1544 = vmatpush1.bf16.msra.mxu0 0
        %1545 = vmatprep.subr.bf16.mxu0 0
        %1546 = vmatpush1.bf16.msra.mxu0 0
        %1547 = vmatprep.subr.bf16.mxu0 0
        %1548 = vmatpush1.bf16.msra.mxu0 0
        %1549 = vmatprep.subr.bf16.mxu0 0
        %1550 = vmatpush1.bf16.msra.mxu0 0
        %1551 = vmatprep.subr.bf16.mxu0 0
        %1552 = vmatpush1.bf16.msra.mxu0 0
        %1553 = vmatprep.subr.bf16.mxu0 0
        %1554 = vmatpush1.bf16.msra.mxu0 0
        %1555 = vmatprep.mubr.bf16.mxu0 0
        %1556 = vmatmul.mubr.bf16.gmra.mrb[0].mxu0 %v1518
        %v1557 = vpop.f32.mrb[0].mxu0
        %v1558 = vadd.f32 0.0, %v1557
        %v1559 = vpop.f32.mrb[0].mxu0
        %v1560 = vpop.f32.mrb[0].mxu0
        %v1561 = vadd.f32 0.0, %v1560
        %v1562 = vpop.f32.mrb[0].mxu0
        %1563 = vdwg.mxu0
        %v1565 = vsel %vm937, %v1463, 0
        %v1568 = vsel %vm1472, %v1467, 0
        %1570 = vmatprep.subr.bf16.mxu0 0
        %1571 = vmatpush1.bf16.msra.mxu0 %v1568
        %1572 = vmatprep.subr.bf16.mxu0 0
        %1573 = vmatpush1.bf16.msra.mxu0 0
        %1574 = vmatprep.subr.bf16.mxu0 0
        %1575 = vmatpush1.bf16.msra.mxu0 0
        %1576 = vmatprep.subr.bf16.mxu0 0
        %1577 = vmatpush1.bf16.msra.mxu0 0
        %1578 = vmatprep.subr.bf16.mxu0 0
        %1579 = vmatpush1.bf16.msra.mxu0 0
        %1580 = vmatprep.subr.bf16.mxu0 0
        %1581 = vmatpush1.bf16.msra.mxu0 0
        %1582 = vmatprep.subr.bf16.mxu0 0
        %1583 = vmatpush1.bf16.msra.mxu0 0
        %1584 = vmatprep.subr.bf16.mxu0 0
        %1585 = vmatpush1.bf16.msra.mxu0 0
        %1586 = vmatprep.subr.bf16.mxu0 0
        %1587 = vmatpush1.bf16.msra.mxu0 0
        %1588 = vmatprep.subr.bf16.mxu0 0
        %1589 = vmatpush1.bf16.msra.mxu0 0
        %1590 = vmatprep.subr.bf16.mxu0 0
        %1591 = vmatpush1.bf16.msra.mxu0 0
        %1592 = vmatprep.subr.bf16.mxu0 0
        %1593 = vmatpush1.bf16.msra.mxu0 0
        %1594 = vmatprep.subr.bf16.mxu0 0
        %1595 = vmatpush1.bf16.msra.mxu0 0
        %1596 = vmatprep.subr.bf16.mxu0 0
        %1597 = vmatpush1.bf16.msra.mxu0 0
        %1598 = vmatprep.subr.bf16.mxu0 0
        %1599 = vmatpush1.bf16.msra.mxu0 0
        %1600 = vmatprep.subr.bf16.mxu0 0
        %1601 = vmatpush1.bf16.msra.mxu0 0
        %1602 = vmatprep.mubr.bf16.mxu0 0
        %1603 = vmatmul.mubr.bf16.gmra.mrb[0].mxu0 %v1565
        %v1604 = vpop.f32.mrb[0].mxu0
        %v1605 = vadd.f32 0.0, %v1604
        %v1606 = vpop.f32.mrb[0].mxu0
        %v1607 = vpop.f32.mrb[0].mxu0
        %v1608 = vadd.f32 0.0, %v1607
        %v1609 = vpop.f32.mrb[0].mxu0
        %1610 = vdwg.mxu0
        %v1612 = vsel %vm937, %v1464, 0
        %v1615 = vsel %vm1472, %v1468, 0
        %1617 = vmatprep.subr.bf16.mxu0 0
        %1618 = vmatpush1.bf16.msra.mxu0 %v1615
        %1619 = vmatprep.subr.bf16.mxu0 0
        %1620 = vmatpush1.bf16.msra.mxu0 0
        %1621 = vmatprep.subr.bf16.mxu0 0
        %1622 = vmatpush1.bf16.msra.mxu0 0
        %1623 = vmatprep.subr.bf16.mxu0 0
        %1624 = vmatpush1.bf16.msra.mxu0 0
        %1625 = vmatprep.subr.bf16.mxu0 0
        %1626 = vmatpush1.bf16.msra.mxu0 0
        %1627 = vmatprep.subr.bf16.mxu0 0
        %1628 = vmatpush1.bf16.msra.mxu0 0
        %1629 = vmatprep.subr.bf16.mxu0 0
        %1630 = vmatpush1.bf16.msra.mxu0 0
        %1631 = vmatprep.subr.bf16.mxu0 0
        %1632 = vmatpush1.bf16.msra.mxu0 0
        %1633 = vmatprep.subr.bf16.mxu0 0
        %1634 = vmatpush1.bf16.msra.mxu0 0
        %1635 = vmatprep.subr.bf16.mxu0 0
        %1636 = vmatpush1.bf16.msra.mxu0 0
        %1637 = vmatprep.subr.bf16.mxu0 0
        %1638 = vmatpush1.bf16.msra.mxu0 0
        %1639 = vmatprep.subr.bf16.mxu0 0
        %1640 = vmatpush1.bf16.msra.mxu0 0
        %1641 = vmatprep.subr.bf16.mxu0 0
        %1642 = vmatpush1.bf16.msra.mxu0 0
        %1643 = vmatprep.subr.bf16.mxu0 0
        %1644 = vmatpush1.bf16.msra.mxu0 0
        %1645 = vmatprep.subr.bf16.mxu0 0
        %1646 = vmatpush1.bf16.msra.mxu0 0
        %1647 = vmatprep.subr.bf16.mxu0 0
        %1648 = vmatpush1.bf16.msra.mxu0 0
        %1649 = vmatprep.mubr.bf16.mxu0 0
        %1650 = vmatmul.mubr.bf16.gmra.mrb[0].mxu0 %v1612
        %v1651 = vpop.f32.mrb[0].mxu0
        %v1652 = vadd.f32 0.0, %v1651
        %v1653 = vpop.f32.mrb[0].mxu0
        %v1654 = vpop.f32.mrb[0].mxu0
        %v1655 = vadd.f32 0.0, %v1654
        %v1656 = vpop.f32.mrb[0].mxu0
        %1657 = vdwg.mxu0
        %v1658 = vadd.f32 %v1511, %v1558
        %v1659 = vadd.f32 %v1514, %v1561
        %v1660 = vadd.f32 %v1658, %v1605
        %v1661 = vadd.f32 %v1659, %v1608
        %v1662 = vadd.f32 %v1660, %v1652
        %v1663 = vadd.f32 %v1661, %v1655
        %v1664 = vld [vmem:[#allocation13] sm:$0x1]
        %v1666 = vlaneseq
        %v1667 = vshrl.u32 %v1666, 7
        %v1668 = vsub.s32 0, %v1667
        %v1669 = vrot.slane %v1664, %v1668
        %v1671 = vadd.f32 %v1662, %v1669
        %v1672 = vadd.f32 %v1663, %v1669
        %v1673 = vadd.f32 %v863, %v1671
        %v1674 = vadd.f32 %v864, %v1672
        %v1675 = vsel %vm889, %v1673, 0.0
        %1676 = vadd.xlane.f32.xlu0 %v1675
        %v1677 = vpop.xlane.xlu0 %1676
        %v1678 = vsel %vm889, %v1674, 0.0
        %1679 = vadd.xlane.f32.xlu0 %v1678
        %v1680 = vpop.xlane.xlu0 %1679
        %v1681 = vrcp.pop 32.0
        %v1682 = vmul.f32 %v1677, %v1681
        %v1683 = vmul.f32 %v1680, %v1681
        %v1684 = vsub.f32 %v1673, %v1682
        %v1685 = vsub.f32 %v1674, %v1683
        %v1686 = vmul.f32 %v1684, %v1684
        %v1687 = vmul.f32 %v1685, %v1685
        %v1688 = vsel %vm889, %v1686, 0.0
        %1689 = vadd.xlane.f32.xlu0 %v1688
        %v1690 = vpop.xlane.xlu0 %1689
        %v1691 = vsel %vm889, %v1687, 0.0
        %1692 = vadd.xlane.f32.xlu0 %v1691
        %v1693 = vpop.xlane.xlu0 %1692
        %v1694 = vmul.f32 %v1690, 0.032258064
        %v1695 = vmul.f32 %v1693, 0.032258064
        %v1696 = vrsqrt.pop %v1694
        %v1697 = vmul.f32 %v1694, %v1696
        %vm1698 = vcmp.eq.f32.partialorder %v1694, inf
        %v1699 = vsel %vm1698, %v1694, %v1697
        %vm1700 = vcmp.eq.f32.partialorder %v1694, 0.0
        %v1701 = vand.u32 %v1694, 2147483648
        %v1702 = vsel %vm1700, %v1701, %v1699
        %v1703 = vrsqrt.pop %v1695
        %v1704 = vmul.f32 %v1695, %v1703
        %vm1705 = vcmp.eq.f32.partialorder %v1695, inf
        %v1706 = vsel %vm1705, %v1695, %v1704
        %vm1707 = vcmp.eq.f32.partialorder %v1695, 0.0
        %v1708 = vand.u32 %v1695, 2147483648
        %v1709 = vsel %vm1707, %v1708, %v1706
        %v1710 = vadd.f32 %v1702, 1e-06
        %v1711 = vadd.f32 %v1709, 1e-06
        %v1712 = vrcp.pop %v1710
        %v1713 = vrcp.pop %v1711
        %v1714 = vld [vmem:[%s13] sm:$0x1]
        %v1715 = vmul.f32 %v1684, %v1712
        %v1716 = vmul.f32 %v1685, %v1713
        %v1718 = vlaneseq
        %v1719 = vshrl.u32 %v1718, 7
        %v1720 = vsub.s32 0, %v1719
        %v1721 = vrot.slane %v1714, %v1720
        %v1723 = vmul.f32 %v1721, %v1715
        %v1724 = vmul.f32 %v1721, %v1716
        %v1725 = vld [vmem:[%s14] sm:$0x1]
        %v1727 = vlaneseq
        %v1728 = vshrl.u32 %v1727, 7
        %v1729 = vsub.s32 0, %v1728
        %v1730 = vrot.slane %v1725, %v1729
        %v1732 = vadd.f32 %v1723, %v1730
        %v1733 = vadd.f32 %v1724, %v1730
        %v1734 = vpack.c.bf16 %v1733, %v1732
        %v1735 = vld [vmem:[%s9] sm:$0xf]
        %v1736 = vld [vmem:[%s9 + $0x4] sm:$0xf]
        %v1737 = vld [vmem:[%s9 + $0x8] sm:$0xf]
        %v1738 = vld [vmem:[%s9 + $0xc] sm:$0xf]
        %v1739 = vld [vmem:[%s10] sm:$0x1]
        %v1741 = vlaneseq
        %v1742 = vshrl.u32 %v1741, 7
        %v1743 = vsub.s32 0, %v1742
        %v1744 = vrot.slane %v1739, %v1743
        %v1750 = vunpack.c.l.b16 %v1735
        %v1751 = vunpack.c.l.b16 %v1736
        %v1752 = vunpack.c.l.b16 %v1737
        %v1753 = vunpack.c.l.b16 %v1738
        %v1754 = vpack.c.b16 %v1751, %v1750
        %v1755 = vpack.c.b16 %v1753, %v1752
        %v1759 = vsel %vm889, %v1734, 0
        %1761 = vmatprep.subr.bf16.mxu0 0
        %1762 = vmatpush1.bf16.msra.mxu0 %v1754
        %1763 = vmatprep.subr.bf16.mxu0 0
        %1764 = vmatpush1.bf16.msra.mxu0 %v1755
        %1765 = vmatprep.subr.bf16.mxu0 0
        %1766 = vmatpush1.bf16.msra.mxu0 0
        %1767 = vmatprep.subr.bf16.mxu0 0
        %1768 = vmatpush1.bf16.msra.mxu0 0
        %1769 = vmatprep.subr.bf16.mxu0 0
        %1770 = vmatpush1.bf16.msra.mxu0 0
        %1771 = vmatprep.subr.bf16.mxu0 0
        %1772 = vmatpush1.bf16.msra.mxu0 0
        %1773 = vmatprep.subr.bf16.mxu0 0
        %1774 = vmatpush1.bf16.msra.mxu0 0
        %1775 = vmatprep.subr.bf16.mxu0 0
        %1776 = vmatpush1.bf16.msra.mxu0 0
        %1777 = vmatprep.subr.bf16.mxu0 0
        %1778 = vmatpush1.bf16.msra.mxu0 0
        %1779 = vmatprep.subr.bf16.mxu0 0
        %1780 = vmatpush1.bf16.msra.mxu0 0
        %1781 = vmatprep.subr.bf16.mxu0 0
        %1782 = vmatpush1.bf16.msra.mxu0 0
        %1783 = vmatprep.subr.bf16.mxu0 0
        %1784 = vmatpush1.bf16.msra.mxu0 0
        %1785 = vmatprep.subr.bf16.mxu0 0
        %1786 = vmatpush1.bf16.msra.mxu0 0
        %1787 = vmatprep.subr.bf16.mxu0 0
        %1788 = vmatpush1.bf16.msra.mxu0 0
        %1789 = vmatprep.subr.bf16.mxu0 0
        %1790 = vmatpush1.bf16.msra.mxu0 0
        %1791 = vmatprep.subr.bf16.mxu0 0
        %1792 = vmatpush1.bf16.msra.mxu0 0
        %1793 = vmatprep.mubr.bf16.mxu0 0
        %1794 = vmatmul.mubr.bf16.gmra.mrb[0].mxu0 %v1759
        %v1795 = vpop.f32.mrb[0].mxu0
        %v1796 = vadd.f32 %v1744, %v1795
        %v1797 = vpop.f32.mrb[0].mxu0
        %v1798 = vpop.f32.mrb[0].mxu0
        %v1799 = vadd.f32 %v1744, %v1798
        %v1800 = vpop.f32.mrb[0].mxu0
        %1801 = vdwg.mxu0
        %v1802 = vmax.f32 %v1796, 0.0
        %v1803 = vmax.f32 %v1799, 0.0
        %v1804 = vpack.c.bf16 %v1803, %v1802
        %v1805 = vld [vmem:[%s11] sm:$0xf]
        %v1806 = vld [vmem:[%s11 + $0x4] sm:$0xf]
        %v1807 = vld [vmem:[%s11 + $0x8] sm:$0xf]
        %v1808 = vld [vmem:[%s11 + $0xc] sm:$0xf]
        %v1809 = vld [vmem:[%s11 + $0x10] sm:$0xf]
        %v1810 = vld [vmem:[%s11 + $0x14] sm:$0xf]
        %v1811 = vld [vmem:[%s11 + $0x18] sm:$0xf]
        %v1812 = vld [vmem:[%s11 + $0x1c] sm:$0xf]
        %v1813 = vld [vmem:[%s11 + $0x20] sm:$0xf]
        %v1814 = vld [vmem:[%s11 + $0x24] sm:$0xf]
        %v1815 = vld [vmem:[%s11 + $0x28] sm:$0xf]
        %v1816 = vld [vmem:[%s11 + $0x2c] sm:$0xf]
        %v1817 = vld [vmem:[%s11 + $0x30] sm:$0xf]
        %v1818 = vld [vmem:[%s11 + $0x34] sm:$0xf]
        %v1819 = vld [vmem:[%s11 + $0x38] sm:$0xf]
        %v1820 = vld [vmem:[%s11 + $0x3c] sm:$0xf]
        %v1821 = vld [vmem:[%s12] sm:$0x1]
        %v1823 = vlaneseq
        %v1824 = vshrl.u32 %v1823, 7
        %v1825 = vsub.s32 0, %v1824
        %v1826 = vrot.slane %v1821, %v1825
        %v1844 = vunpack.c.l.b16 %v1805
        %v1845 = vunpack.c.l.b16 %v1806
        %v1846 = vunpack.c.l.b16 %v1807
        %v1847 = vunpack.c.l.b16 %v1808
        %v1848 = vunpack.c.l.b16 %v1809
        %v1849 = vunpack.c.l.b16 %v1810
        %v1850 = vunpack.c.l.b16 %v1811
        %v1851 = vunpack.c.l.b16 %v1812
        %v1852 = vunpack.c.l.b16 %v1813
        %v1853 = vunpack.c.l.b16 %v1814
        %v1854 = vunpack.c.l.b16 %v1815
        %v1855 = vunpack.c.l.b16 %v1816
        %v1856 = vunpack.c.l.b16 %v1817
        %v1857 = vunpack.c.l.b16 %v1818
        %v1858 = vunpack.c.l.b16 %v1819
        %v1859 = vunpack.c.l.b16 %v1820
        %v1860 = vpack.c.b16 %v1845, %v1844
        %v1861 = vpack.c.b16 %v1847, %v1846
        %v1862 = vpack.c.b16 %v1849, %v1848
        %v1863 = vpack.c.b16 %v1851, %v1850
        %v1864 = vpack.c.b16 %v1853, %v1852
        %v1865 = vpack.c.b16 %v1855, %v1854
        %v1866 = vpack.c.b16 %v1857, %v1856
        %v1867 = vpack.c.b16 %v1859, %v1858
        %1876 = vmatprep.subr.bf16.mxu0 0
        %1877 = vmatpush1.bf16.msra.mxu0 %v1860
        %1878 = vmatprep.subr.bf16.mxu0 0
        %1879 = vmatpush1.bf16.msra.mxu0 %v1861
        %1880 = vmatprep.subr.bf16.mxu0 0
        %1881 = vmatpush1.bf16.msra.mxu0 %v1862
        %1882 = vmatprep.subr.bf16.mxu0 0
        %1883 = vmatpush1.bf16.msra.mxu0 %v1863
        %1884 = vmatprep.subr.bf16.mxu0 0
        %1885 = vmatpush1.bf16.msra.mxu0 %v1864
        %1886 = vmatprep.subr.bf16.mxu0 0
        %1887 = vmatpush1.bf16.msra.mxu0 %v1865
        %1888 = vmatprep.subr.bf16.mxu0 0
        %1889 = vmatpush1.bf16.msra.mxu0 %v1866
        %1890 = vmatprep.subr.bf16.mxu0 0
        %1891 = vmatpush1.bf16.msra.mxu0 %v1867
        %1892 = vmatprep.subr.bf16.mxu0 0
        %1893 = vmatpush1.bf16.msra.mxu0 0
        %1894 = vmatprep.subr.bf16.mxu0 0
        %1895 = vmatpush1.bf16.msra.mxu0 0
        %1896 = vmatprep.subr.bf16.mxu0 0
        %1897 = vmatpush1.bf16.msra.mxu0 0
        %1898 = vmatprep.subr.bf16.mxu0 0
        %1899 = vmatpush1.bf16.msra.mxu0 0
        %1900 = vmatprep.subr.bf16.mxu0 0
        %1901 = vmatpush1.bf16.msra.mxu0 0
        %1902 = vmatprep.subr.bf16.mxu0 0
        %1903 = vmatpush1.bf16.msra.mxu0 0
        %1904 = vmatprep.subr.bf16.mxu0 0
        %1905 = vmatpush1.bf16.msra.mxu0 0
        %1906 = vmatprep.subr.bf16.mxu0 0
        %1907 = vmatpush1.bf16.msra.mxu0 0
        %1908 = vmatprep.mubr.bf16.mxu0 0
        %1909 = vmatmul.mubr.bf16.gmra.mrb[0].mxu0 %v1804
        %v1910 = vpop.f32.mrb[0].mxu0
        %v1911 = vadd.f32 %v1826, %v1910
        %v1912 = vpop.f32.mrb[0].mxu0
        %v1913 = vpop.f32.mrb[0].mxu0
        %v1914 = vadd.f32 %v1826, %v1913
        %v1915 = vpop.f32.mrb[0].mxu0
        %1916 = vdwg.mxu0
        %v1917 = vadd.f32 %v1732, %v1911
        %v1918 = vadd.f32 %v1733, %v1914
        %v1919 = vsel %vm889, %v1917, 0.0
        %1920 = vadd.xlane.f32.xlu0 %v1919
        %v1921 = vpop.xlane.xlu0 %1920
        %v1922 = vsel %vm889, %v1918, 0.0
        %1923 = vadd.xlane.f32.xlu0 %v1922
        %v1924 = vpop.xlane.xlu0 %1923
        %v1925 = vmul.f32 %v1921, %v1681
        %v1926 = vmul.f32 %v1924, %v1681
        %v1927 = vsub.f32 %v1917, %v1925
        %v1928 = vsub.f32 %v1918, %v1926
        %v1929 = vmul.f32 %v1927, %v1927
        %v1930 = vmul.f32 %v1928, %v1928
        %v1931 = vsel %vm889, %v1929, 0.0
        %1932 = vadd.xlane.f32.xlu0 %v1931
        %v1933 = vpop.xlane.xlu0 %1932
        %v1934 = vsel %vm889, %v1930, 0.0
        %1935 = vadd.xlane.f32.xlu0 %v1934
        %v1936 = vpop.xlane.xlu0 %1935
        %v1937 = vmul.f32 %v1933, 0.032258064
        %v1938 = vmul.f32 %v1936, 0.032258064
        %v1939 = vrsqrt.pop %v1937
        %v1940 = vmul.f32 %v1937, %v1939
        %vm1941 = vcmp.eq.f32.partialorder %v1937, inf
        %v1942 = vsel %vm1941, %v1937, %v1940
        %vm1943 = vcmp.eq.f32.partialorder %v1937, 0.0
        %v1944 = vand.u32 %v1937, 2147483648
        %v1945 = vsel %vm1943, %v1944, %v1942
        %v1946 = vrsqrt.pop %v1938
        %v1947 = vmul.f32 %v1938, %v1946
        %vm1948 = vcmp.eq.f32.partialorder %v1938, inf
        %v1949 = vsel %vm1948, %v1938, %v1947
        %vm1950 = vcmp.eq.f32.partialorder %v1938, 0.0
        %v1951 = vand.u32 %v1938, 2147483648
        %v1952 = vsel %vm1950, %v1951, %v1949
        %v1953 = vadd.f32 %v1945, 1e-06
        %v1954 = vadd.f32 %v1952, 1e-06
        %v1955 = vrcp.pop %v1953
        %v1956 = vrcp.pop %v1954
        %v1957 = vld [vmem:[%s15] sm:$0x1]
        %v1958 = vmul.f32 %v1927, %v1955
        %v1959 = vmul.f32 %v1928, %v1956
        %v1961 = vlaneseq
        %v1962 = vshrl.u32 %v1961, 7
        %v1963 = vsub.s32 0, %v1962
        %v1964 = vrot.slane %v1957, %v1963
        %v1966 = vmul.f32 %v1964, %v1958
        %v1967 = vmul.f32 %v1964, %v1959
        %v1968 = vld [vmem:[%s16] sm:$0x1]
        %v1970 = vlaneseq
        %v1971 = vshrl.u32 %v1970, 7
        %v1972 = vsub.s32 0, %v1971
        %v1973 = vrot.slane %v1968, %v1972
        %v1975 = vadd.f32 %v1966, %v1973
        %v1976 = vadd.f32 %v1967, %v1973
        %1977 = vst.msk [vmem:[%s691] sm:$0xff] %vm889, %v1975
        %1978 = vst.msk [vmem:[%s691 + $0x8] sm:$0xff] %vm889, %v1976
        %s1979 = sand.u32 %s436, 1
        %s1980 = scalar_lea.sflag [#allocation7], %s1979
        %s1981 = sand.u32 %s436, 1
        %s1982 = smul.addr %s1981, 16
        %s1983 = scalar_lea.vmem [#allocation14], %s1982
        // Predicated region
        $region113: #{tpu_custom_call.1} parent=87 // pred_check
          %p1984 = pneg %p446
        $region114: #{tpu_custom_call.1} parent=87 // pred_check_branch
          %1986 = sbr.rel (%p1984) target = $region116
        $region115: #{tpu_custom_call.1} parent=87 // pred_region
          %s1987 = smul.u32 2, %s43
          %s1989 = ssub.s32 256, 256
          %1990 = vsyncadd %s1980, %s1989
          %s1991 = smul.addr %s42, 4
          %s1992 = sadd.s32 %s1987, %s1991
          %s1993 = smul.addr %s1992, 128
          %s1994 = scalar_lea.hbm %s17, %s1993
          %s1995 = sshll.u32 %s1983, 4
          %s1996 = int_to_ptr.vmem [resolvable:$true] %s1995
          %2001 = dma.vmem_to_hbm [thread:$0]  %s1996, 256, %s1994, %s1980, 128, 128, 8
        $region116: #{tpu_custom_call.1} parent=87 // pred_fallthru
          _
      $region88: #{tpu_custom_call.1} parent=5 // pred_fallthru
        _
      %p2002 = scmp.le.s32.totalorder 2, %s33
      // Predicated region
      $region117: #{tpu_custom_call.1} parent=5 // pred_check
        %p2003 = pneg %p2002
      $region118: #{tpu_custom_call.1} parent=5 // pred_check_branch
        %2005 = sbr.rel (%p2003) target = $region120
      $region119: #{tpu_custom_call.1} parent=5 // pred_region
        %s2006 = ssub.s32 %s33, 2
        // Predicated region
        $region121: #{tpu_custom_call.1} parent=119 // pred_check
          %p2007 = pneg %p452
        $region122: #{tpu_custom_call.1} parent=119 // pred_check_branch
          %2009 = sbr.rel (%p2007) target = $region124
        $region123: #{tpu_custom_call.1} parent=119 // pred_region
          %s2010 = sand.u32 %s437, 1
          %s2011 = scalar_lea.sflag [#allocation7], %s2010
          %s2012 = sand.u32 %s437, 1
          %s2013 = smul.addr %s2012, 16
          %s2014 = scalar_lea.vmem [#allocation14], %s2013
          %2015 = dma.done %s2011, 256
        $region124: #{tpu_custom_call.1} parent=119 // pred_fallthru
          _
      $region120: #{tpu_custom_call.1} parent=5 // pred_fallthru
        _
    $region6: #{tpu_custom_call.1} parent=1 // loop_footer
      %s37 = sadd.s32 1, %s33
    $region7: #{tpu_custom_call.1} parent=1 // loop_footer_branch
      %32 = sbr.rel target = $region3
    $region8: #{tpu_custom_call.1} parent=1 // loop_exit
      _
    %2016 = vsyncpa [#allocation6], 1
    %s2017 = scalar_lea.sflag [#allocation6], 1
    %2018 = vsyncpa %s2017, 1
    %2019 = vsyncpa [#allocation9], 1
    %s2020 = scalar_lea.sflag [#allocation9], 1
    %2021 = vsyncpa %s2020, 1
    %2022 = vsyncpa [#allocation12], 1
    %2023 = vsyncpa [#allocation7], 1
    %s2024 = scalar_lea.sflag [#allocation7], 1
    %2025 = vsyncpa %s2024, 1

</llo_original>
